<compile_context>
chip_gen: v7x
topology: tpu7x:2x2x1
jax: 0.10.0
libtpu: 0.0.40
codegen_flags: <defaults>
</compile_context>

<pallas_src>
import functools
import math

import jax
import jax.numpy as jnp
from jax import lax
from jax.experimental import pallas as pl
from jax.experimental.pallas import tpu as pltpu

EPS = 1e-07
_TARGET_BLOCK_BYTES = 4 * 1024 * 1024   # per input buffer (Pallas double-buffers)


def _nce_kernel(x_ref, o_ref, acc_ref, *, k, c, const, bsz, valid_rows,
                block_rows, ragged):
    pid = pl.program_id(0)
    last = pl.num_programs(0) - 1

    @pl.when(pid == 0)
    def _():
        acc_ref[...] = jnp.zeros_like(acc_ref)
        o_ref[...] = jnp.zeros_like(o_ref)

    def accumulate(mask_rows):
        x = x_ref[...].astype(jnp.float32)                    # (block_rows, L)
        lane = lax.broadcasted_iota(jnp.int32, x.shape, 1)
        pos = (lane % k) == 0                                 # positive-score lanes
        # One log for the shared "x + noise + eps" term plus one log over the
        # positive lanes (fill value 1.0 -> contributes exactly 0 elsewhere).
        contrib = jnp.log(jnp.where(pos, x, 1.0)) - jnp.log(x + c)
        if mask_rows:
            # Ragged final block: rows past `valid_rows` hold undefined data.
            # Select (never multiply) after the logs so garbage-driven NaN/Inf
            # can never enter the sum.
            row = lax.broadcasted_iota(jnp.int32, x.shape, 0) + pid * block_rows
            contrib = jnp.where(row < valid_rows, contrib, 0.0)
        acc_ref[...] += jnp.sum(contrib, axis=0, keepdims=True)   # (1, L)

    if ragged:
        @pl.when(pid != last)
        def _():
            accumulate(False)          # mask-free fast path for interior blocks

        @pl.when(pid == last)
        def _():
            accumulate(True)
    else:
        accumulate(False)

    @pl.when(pid == last)
    def _():
        s = jnp.sum(acc_ref[...], axis=1, keepdims=True)      # (1, 1)
        o_ref[...] = -(s + const) / float(bsz)


def _pick_block_rows(total_rows, lane_width, itemsize, block_rows):
    if block_rows is None:
        padded_lane_bytes = ((lane_width + 127) // 128) * 128 * itemsize
        block_rows = max(8, _TARGET_BLOCK_BYTES // padded_lane_bytes)
    if block_rows >= total_rows:
        return total_rows                  # single full-extent block (always legal)
    return max(8, (block_rows // 8) * 8)   # interior blocks: sublane multiple of 8


def nce_criterion(x, n_data, *, block_rows=None):
    """Pallas TPU implementation of NCECriterion.forward.  x: (bsz, K = m+1)."""
    bsz, K = x.shape
    m = K - 1
    noise = float(m) / float(n_data)
    c = noise + EPS
    const = float(bsz) * float(m) * math.log(noise) if m > 0 else 0.0

    if bsz % 128 == 0:
        # Free row-major reshape -> lane-dense view, no data movement.
        rows, lanes = bsz // 128, 128 * K
        xv = x.reshape(rows, lanes)
    else:
        # Natural layout (minor dim == K == full dim) -> no HBM copy either.
        rows, lanes = bsz, K
        xv = x

    br = _pick_block_rows(rows, lanes, x.dtype.itemsize, block_rows)
    num_blocks = (rows + br - 1) // br
    ragged = (rows % br) != 0

    kernel = functools.partial(
        _nce_kernel, k=K, c=c, const=const, bsz=bsz, valid_rows=rows,
        block_rows=br, ragged=ragged)

    out = pl.pallas_call(
        kernel,
        out_shape=jax.ShapeDtypeStruct((1, 1), jnp.float32),
        grid_spec=pltpu.PrefetchScalarGridSpec(
            num_scalar_prefetch=0,
            grid=(num_blocks,),
            in_specs=[pl.BlockSpec((br, lanes), lambda i: (i, 0))],
            out_specs=pl.BlockSpec((1, 1), lambda i: (0, 0)),
            scratch_shapes=[pltpu.VMEM((1, lanes), jnp.float32)],
        ),
        compiler_params=pltpu.CompilerParams(
            # Single grid axis carries the running sum -> must stay sequential.
            dimension_semantics=("arbitrary",),
        ),
    )(xv)
    return out.reshape((1,))


def _nce_reference(x, n_data):
    """Pure-JAX reference mirroring the PyTorch module exactly."""
    x = x.astype(jnp.float32)
    bsz = x.shape[0]
    m = x.shape[1] - 1
    Pn = 1.0 / float(n_data)
    P_pos = x[:, 0]
    log_D1 = jnp.log(P_pos / (P_pos + m * Pn + EPS))
    P_neg = x[:, 1:]
    log_D0 = jnp.log((m * Pn) / (P_neg + m * Pn + EPS))
    loss = -(jnp.sum(log_D1) + jnp.sum(log_D0)) / bsz
    return jnp.reshape(loss, (1,))


if __name__ == "__main__":
    n_data = 1000
    key = jax.random.PRNGKey(0)
    k1, k2 = jax.random.split(key)

    # Path 1: lane-dense reshaped layout (bsz % 128 == 0).  block_rows=8 forces
    # a 3-step grid with a ragged last block (21 rows, blocks of 8): exercises
    # the scratch accumulator, the pl.when fast/masked paths, and pipelining.
    bsz, K = 2688, 17
    x = jax.random.uniform(k1, (bsz, K), dtype=jnp.float32,
                           minval=1e-4, maxval=1.0)
    f_dense = jax.jit(functools.partial(nce_criterion, n_data=n_data, block_rows=8))
    loss = jax.block_until_ready(f_dense(x))
    ref = _nce_reference(x, n_data)
    if loss.shape != (1,):
        raise AssertionError(f"bad output shape: {loss.shape}")
    if not jnp.allclose(loss, ref, rtol=1e-4, atol=1e-5):
        raise AssertionError(f"dense-path mismatch: pallas={loss} ref={ref}")

    # Path 2: natural (bsz, K) layout for bsz not a multiple of 128.
    bsz2 = 300
    x2 = jax.random.uniform(k2, (bsz2, K), dtype=jnp.float32,
                            minval=1e-4, maxval=1.0)
    f_nat = jax.jit(functools.partial(nce_criterion, n_data=n_data))
    loss2 = jax.block_until_ready(f_nat(x2))
    ref2 = _nce_reference(x2, n_data)
    if loss2.shape != (1,):
        raise AssertionError(f"bad output shape: {loss2.shape}")
    if not jnp.allclose(loss2, ref2, rtol=1e-4, atol=1e-5):
        raise AssertionError(f"natural-path mismatch: pallas={loss2} ref={ref2}")

    print("KERNEL_OK")
</pallas_src>

<mosaic_0001>
module attributes {stable_mosaic.version = 11 : i64} {
  func.func @_nce_kernel(%arg0: i32, %arg1: memref<8x2176xf32, #tpu.memory_space<vmem>>, %arg2: memref<1x1xf32, #tpu.memory_space<vmem>>, %arg3: memref<1x2176xf32, #tpu.memory_space<vmem>>) attributes {dimension_semantics = [#tpu.dimension_semantics<arbitrary>], iteration_bounds = array<i64: 3>, scalar_prefetch = 0 : i64, scratch_operands = 1 : i64, tpu.core_type = #tpu.core_type<tc>, window_params = [{transform_indices = @transform_0, window_bounds = array<i64: 8, 2176>}, {pipeline_mode = #tpu.pipeline_mode<synchronous>, transform_indices = @transform_1, window_bounds = array<i64: 1, 1>}]} {
    %c0_i32 = arith.constant 0 : i32
    %0 = arith.cmpi eq, %arg0, %c0_i32 : i32
    %1 = arith.extui %0 : i1 to i32
    %c0_i32_0 = arith.constant 0 : i32
    %2 = arith.cmpi ne, %1, %c0_i32_0 : i32
    scf.if %2 {
      %cst = arith.constant 0.000000e+00 : f32
      %12 = vector.broadcast %cst : f32 to vector<1x2176xf32>
      %c0 = arith.constant 0 : index
      %c0_6 = arith.constant 0 : index
      %13 = vector.load %arg3[%c0, %c0_6] : memref<1x2176xf32, #tpu.memory_space<vmem>>, vector<1x2176xf32>
      tpu.vector_store %arg3[%c0, %c0_6], %12 {strides = array<i32>} : memref<1x2176xf32, #tpu.memory_space<vmem>>, vector<1x2176xf32>,
      %cst_7 = arith.constant 0.000000e+00 : f32
      %14 = vector.broadcast %cst_7 : f32 to vector<1x1xf32>
      %c0_8 = arith.constant 0 : index
      %c0_9 = arith.constant 0 : index
      %15 = vector.load %arg2[%c0_8, %c0_9] : memref<1x1xf32, #tpu.memory_space<vmem>>, vector<1x1xf32>
      tpu.vector_store %arg2[%c0_8, %c0_9], %14 {strides = array<i32>} : memref<1x1xf32, #tpu.memory_space<vmem>>, vector<1x1xf32>,
    } else {
    }
    %c2_i32 = arith.constant 2 : i32
    %3 = arith.cmpi ne, %arg0, %c2_i32 : i32
    %4 = arith.extui %3 : i1 to i32
    %c0_i32_1 = arith.constant 0 : i32
    %5 = arith.cmpi ne, %4, %c0_i32_1 : i32
    scf.if %5 {
      %c0 = arith.constant 0 : index
      %c0_6 = arith.constant 0 : index
      %12 = vector.load %arg1[%c0, %c0_6] : memref<8x2176xf32, #tpu.memory_space<vmem>>, vector<8x2176xf32>
      %13 = tpu.iota {dimensions = array<i32: 1>} : vector<8x2176xi32>
      %c17_i32 = arith.constant 17 : i32
      %c0_i32_7 = arith.constant 0 : i32
      %14 = arith.cmpi eq, %c17_i32, %c0_i32_7 : i32
      %c1_i32 = arith.constant 1 : i32
      %15 = arith.select %14, %c1_i32, %c17_i32 : i32
      %16 = vector.broadcast %15 : i32 to vector<8x2176xi32>
      %17 = arith.remsi %13, %16 : vector<8x2176xi32>
      %c0_i32_8 = arith.constant 0 : i32
      %18 = vector.broadcast %c0_i32_8 : i32 to vector<8x2176xi32>
      %19 = arith.cmpi ne, %17, %18 : vector<8x2176xi32>
      %c0_i32_9 = arith.constant 0 : i32
      %20 = vector.broadcast %c0_i32_9 : i32 to vector<8x2176xi32>
      %21 = arith.cmpi slt, %17, %20 : vector<8x2176xi32>
      %c0_i32_10 = arith.constant 0 : i32
      %22 = arith.cmpi slt, %15, %c0_i32_10 : i32
      %23 = vector.broadcast %22 : i1 to vector<8x2176xi1>
      %24 = vector.broadcast %23 : vector<8x2176xi1> to vector<8x2176xi1>
      %25 = arith.xori %21, %24 : vector<8x2176xi1>
      %26 = arith.andi %25, %19 : vector<8x2176xi1>
      %27 = vector.broadcast %15 : i32 to vector<8x2176xi32>
      %28 = arith.addi %17, %27 : vector<8x2176xi32>
      %29 = arith.select %26, %28, %17 : vector<8x2176xi1>, vector<8x2176xi32>
      %c0_i32_11 = arith.constant 0 : i32
      %30 = vector.broadcast %c0_i32_11 : i32 to vector<8x2176xi32>
      %31 = arith.cmpi eq, %29, %30 : vector<8x2176xi32>
      %cst = arith.constant 1.000000e+00 : f32
      %32 = vector.broadcast %cst : f32 to vector<8x2176xf32>
      %33 = arith.select %31, %12, %32 : vector<8x2176xi1>, vector<8x2176xf32>
      %34 = math.log %33 : vector<8x2176xf32>
      %cst_12 = arith.constant 1.600010e-02 : f32
      %35 = vector.broadcast %cst_12 : f32 to vector<8x2176xf32>
      %36 = arith.addf %12, %35 : vector<8x2176xf32>
      %37 = math.log %36 : vector<8x2176xf32>
      %38 = arith.subf %34, %37 : vector<8x2176xf32>
      %c0_13 = arith.constant 0 : index
      %c0_14 = arith.constant 0 : index
      %39 = vector.load %arg3[%c0_13, %c0_14] : memref<1x2176xf32, #tpu.memory_space<vmem>>, vector<1x2176xf32>
      %cst_15 = arith.constant dense<0.000000e+00> : vector<2176xf32>
      %40 = vector.multi_reduction <add>, %38, %cst_15 [0] : vector<8x2176xf32> to vector<2176xf32>
      %41 = vector.shape_cast %40 : vector<2176xf32> to vector<1x2176xf32>
      %42 = arith.addf %39, %41 : vector<1x2176xf32>
      %c0_16 = arith.constant 0 : index
      %c0_17 = arith.constant 0 : index
      %43 = vector.load %arg3[%c0_16, %c0_17] : memref<1x2176xf32, #tpu.memory_space<vmem>>, vector<1x2176xf32>
      tpu.vector_store %arg3[%c0_16, %c0_17], %42 {strides = array<i32>} : memref<1x2176xf32, #tpu.memory_space<vmem>>, vector<1x2176xf32>,
    } else {
    }
    %c2_i32_2 = arith.constant 2 : i32
    %6 = arith.cmpi eq, %arg0, %c2_i32_2 : i32
    %7 = arith.extui %6 : i1 to i32
    %c0_i32_3 = arith.constant 0 : i32
    %8 = arith.cmpi ne, %7, %c0_i32_3 : i32
    scf.if %8 {
      %c0 = arith.constant 0 : index
      %c0_6 = arith.constant 0 : index
      %12 = vector.load %arg1[%c0, %c0_6] : memref<8x2176xf32, #tpu.memory_space<vmem>>, vector<8x2176xf32>
      %13 = tpu.iota {dimensions = array<i32: 1>} : vector<8x2176xi32>
      %c17_i32 = arith.constant 17 : i32
      %c0_i32_7 = arith.constant 0 : i32
      %14 = arith.cmpi eq, %c17_i32, %c0_i32_7 : i32
      %c1_i32 = arith.constant 1 : i32
      %15 = arith.select %14, %c1_i32, %c17_i32 : i32
      %16 = vector.broadcast %15 : i32 to vector<8x2176xi32>
      %17 = arith.remsi %13, %16 : vector<8x2176xi32>
      %c0_i32_8 = arith.constant 0 : i32
      %18 = vector.broadcast %c0_i32_8 : i32 to vector<8x2176xi32>
      %19 = arith.cmpi ne, %17, %18 : vector<8x2176xi32>
      %c0_i32_9 = arith.constant 0 : i32
      %20 = vector.broadcast %c0_i32_9 : i32 to vector<8x2176xi32>
      %21 = arith.cmpi slt, %17, %20 : vector<8x2176xi32>
      %c0_i32_10 = arith.constant 0 : i32
      %22 = arith.cmpi slt, %15, %c0_i32_10 : i32
      %23 = vector.broadcast %22 : i1 to vector<8x2176xi1>
      %24 = vector.broadcast %23 : vector<8x2176xi1> to vector<8x2176xi1>
      %25 = arith.xori %21, %24 : vector<8x2176xi1>
      %26 = arith.andi %25, %19 : vector<8x2176xi1>
      %27 = vector.broadcast %15 : i32 to vector<8x2176xi32>
      %28 = arith.addi %17, %27 : vector<8x2176xi32>
      %29 = arith.select %26, %28, %17 : vector<8x2176xi1>, vector<8x2176xi32>
      %c0_i32_11 = arith.constant 0 : i32
      %30 = vector.broadcast %c0_i32_11 : i32 to vector<8x2176xi32>
      %31 = arith.cmpi eq, %29, %30 : vector<8x2176xi32>
      %cst = arith.constant 1.000000e+00 : f32
      %32 = vector.broadcast %cst : f32 to vector<8x2176xf32>
      %33 = arith.select %31, %12, %32 : vector<8x2176xi1>, vector<8x2176xf32>
      %34 = math.log %33 : vector<8x2176xf32>
      %cst_12 = arith.constant 1.600010e-02 : f32
      %35 = vector.broadcast %cst_12 : f32 to vector<8x2176xf32>
      %36 = arith.addf %12, %35 : vector<8x2176xf32>
      %37 = math.log %36 : vector<8x2176xf32>
      %38 = arith.subf %34, %37 : vector<8x2176xf32>
      %39 = tpu.iota {dimensions = array<i32: 0>} : vector<8x2176xi32>
      %c8_i32 = arith.constant 8 : i32
      %40 = arith.muli %arg0, %c8_i32 : i32
      %41 = vector.broadcast %40 : i32 to vector<8x2176xi32>
      %42 = arith.addi %39, %41 : vector<8x2176xi32>
      %c21_i32 = arith.constant 21 : i32
      %43 = vector.broadcast %c21_i32 : i32 to vector<8x2176xi32>
      %44 = arith.cmpi slt, %42, %43 : vector<8x2176xi32>
      %cst_13 = arith.constant 0.000000e+00 : f32
      %45 = vector.broadcast %cst_13 : f32 to vector<8x2176xf32>
      %46 = arith.select %44, %38, %45 : vector<8x2176xi1>, vector<8x2176xf32>
      %c0_14 = arith.constant 0 : index
      %c0_15 = arith.constant 0 : index
      %47 = vector.load %arg3[%c0_14, %c0_15] : memref<1x2176xf32, #tpu.memory_space<vmem>>, vector<1x2176xf32>
      %cst_16 = arith.constant dense<0.000000e+00> : vector<2176xf32>
      %48 = vector.multi_reduction <add>, %46, %cst_16 [0] : vector<8x2176xf32> to vector<2176xf32>
      %49 = vector.shape_cast %48 : vector<2176xf32> to vector<1x2176xf32>
      %50 = arith.addf %47, %49 : vector<1x2176xf32>
      %c0_17 = arith.constant 0 : index
      %c0_18 = arith.constant 0 : index
      %51 = vector.load %arg3[%c0_17, %c0_18] : memref<1x2176xf32, #tpu.memory_space<vmem>>, vector<1x2176xf32>
      tpu.vector_store %arg3[%c0_17, %c0_18], %50 {strides = array<i32>} : memref<1x2176xf32, #tpu.memory_space<vmem>>, vector<1x2176xf32>,
    } else {
    }
    %c2_i32_4 = arith.constant 2 : i32
    %9 = arith.cmpi eq, %arg0, %c2_i32_4 : i32
    %10 = arith.extui %9 : i1 to i32
    %c0_i32_5 = arith.constant 0 : i32
    %11 = arith.cmpi ne, %10, %c0_i32_5 : i32
    scf.if %11 {
      %c0 = arith.constant 0 : index
      %c0_6 = arith.constant 0 : index
      %12 = vector.load %arg3[%c0, %c0_6] : memref<1x2176xf32, #tpu.memory_space<vmem>>, vector<1x2176xf32>
      %cst = arith.constant dense<0.000000e+00> : vector<1xf32>
      %13 = vector.multi_reduction <add>, %12, %cst [1] : vector<1x2176xf32> to vector<1xf32>
      %14 = vector.shape_cast %13 : vector<1xf32> to vector<1x1xf32>
      %cst_7 = arith.constant -177845.25 : f32
      %15 = vector.broadcast %cst_7 : f32 to vector<1x1xf32>
      %16 = arith.addf %14, %15 : vector<1x1xf32>
      %cst_8 = arith.constant 0.000000e+00 : f32
      %17 = vector.broadcast %cst_8 : f32 to vector<1x1xf32>
      %18 = arith.subf %17, %16 : vector<1x1xf32>
      %cst_9 = arith.constant 2.688000e+03 : f32
      %19 = vector.broadcast %cst_9 : f32 to vector<1x1xf32>
      %20 = arith.divf %18, %19 : vector<1x1xf32>
      %c0_10 = arith.constant 0 : index
      %c0_11 = arith.constant 0 : index
      %21 = vector.load %arg2[%c0_10, %c0_11] : memref<1x1xf32, #tpu.memory_space<vmem>>, vector<1x1xf32>
      tpu.vector_store %arg2[%c0_10, %c0_11], %20 {strides = array<i32>} : memref<1x1xf32, #tpu.memory_space<vmem>>, vector<1x1xf32>,
    } else {
    }
    return
  }
  func.func @transform_0(%arg0: i32) -> (i32, i32) {
    %c0_i32 = arith.constant 0 : i32
    %c0_i32_0 = arith.constant 0 : i32
    return %arg0, %c0_i32 : i32, i32
  }
  func.func @transform_1(%arg0: i32) -> (i32, i32) {
    %c0_i32 = arith.constant 0 : i32
    %c0_i32_0 = arith.constant 0 : i32
    %c0_i32_1 = arith.constant 0 : i32
    return %c0_i32, %c0_i32_0 : i32, i32
  }
}

</mosaic_0001>

<llo_original>
// kernel: nce_criterion.1
$region0: #{nce_criterion.1}
  #allocation0 [shape = 'u32[]', space=smem, size = 0x4, offset = 0x4, fixed_abs, tag = 'smem constant byte address 0x4 - core index']
  #allocation1 [shape = 'u32[144,128]{1,0:T(1,128)}', space=vmem, size = 0x12000, scoped, tag = 'internal scratch']
  #allocation2 [shape = 'f32[1,2176]{1,0:T(1,128)}', space=vmem, size = 0x2200, scoped, tag = 'scratch operand']
  %s0 = inlined_call_operand.vmem [shape: f32[21,2176], index: 0, kind: input, shape index: {}]
  %s1 = inlined_call_operand.hbm [shape: f32[1,1], index: 1, kind: output, shape index: {}]
  %s2 = sld [smem:[#allocation0]]
  $region49: #{nce_criterion.1} parent=0
    _
  %s4 = ssub.s32 1, %s2
  %s5 = scalar_select 0, %s4, %s2
  $region1: #{nce_criterion.1} parent=0
    #allocation3 [shape = 'u8[512]{0}', space=vmem, size = 0x400, scoped, tag = 'output window, operand 0, single buffered']
    #allocation4 [shape = 's32[2]{0}', space=sflag, size = 0x8, scoped, tag = 'scoped memory for nce_criterion.1']
    %6 = vsyncpa [#allocation4], 0
    loop: start=0, step=1, limit=5
    $region2: #{nce_criterion.1} parent=1 // loop_pre_header
      _
    $region3: #{nce_criterion.1} parent=1 // loop_header
      %s8 = sphi 0, %s12
      %p9 = scmp.ge.s32.totalorder %s8, 5
      %s18 = sphi 0, %s20
      %s21 = sphi 0, %s18
      %s22 = sphi 0, %s21
      %s38 = sphi 0, %s22
      %s42 = sphi 0, %s42
      %s44 = sphi 0, %s42
      %s45 = sphi 0, %s44
      %s59 = sphi 0, %s45
    $region4: #{nce_criterion.1} parent=1 // loop_header_branch
      %11 = sbr.rel (%p9) target = $region8
    $region5: #{nce_criterion.1} parent=1 // loop_body
      %s13 = ssub.s32 %s8, 1
      %s14 = ssub.s32 %s8, 2
      %s15 = sadd.s32 %s8, 1
      %s16 = ssub.s32 %s8, %s15
      %p17 = scmp.eq.s32.totalorder %s16, 0
      %s19 = sadd.s32 %s18, 1
      %s20 = scalar_select %p17, %s18, %s19
      %p23 = pneg %p17
      %p24 = scmp.eq.s32.totalorder %s8, 2
      %p25 = por %p23, %p24
      %p26 = scmp.ne.s32.totalorder %s18, %s21
      %p27 = scmp.eq.s32.totalorder %s8, 0
      %p28 = por %p26, %p27
      %p29 = scmp.ne.s32.totalorder %s18, %s21
      %p30 = scmp.eq.s32.totalorder %s13, 2
      %p31 = por %p29, %p30
      %p32 = scmp.ne.s32.totalorder %s21, %s22
      %p33 = scmp.eq.s32.totalorder %s13, 0
      %p34 = por %p32, %p33
      %p35 = scmp.ne.s32.totalorder %s21, %s22
      %p36 = scmp.eq.s32.totalorder %s14, 2
      %p37 = por %p35, %p36
      %p39 = scmp.ne.s32.totalorder %s22, %s38
      %p40 = scmp.eq.s32.totalorder %s14, 0
      %p41 = por %p39, %p40
      %s43 = sadd.s32 %s42, 1
      %p46 = scmp.eq.s32.totalorder %s8, 2
      %p47 = scmp.ne.s32.totalorder %s42, %s44
      %p48 = scmp.eq.s32.totalorder %s8, 0
      %p49 = por %p47, %p48
      %p50 = scmp.ne.s32.totalorder %s42, %s44
      %p51 = scmp.eq.s32.totalorder %s13, 2
      %p52 = por %p50, %p51
      %p53 = scmp.ne.s32.totalorder %s44, %s45
      %p54 = scmp.eq.s32.totalorder %s13, 0
      %p55 = por %p53, %p54
      %p56 = scmp.ne.s32.totalorder %s44, %s45
      %p57 = scmp.eq.s32.totalorder %s14, 2
      %p58 = por %p56, %p57
      %p60 = scmp.ne.s32.totalorder %s45, %s59
      %p61 = scmp.eq.s32.totalorder %s14, 0
      %p62 = por %p60, %p61
      %p63 = scmp.le.s32.totalorder 1, %s8
      %p64 = scmp.lt.s32.totalorder %s8, 4
      %p65 = pnand %p63, %p64
      %p66 = pneg %p65
      // Predicated region
      $region9: #{nce_criterion.1} parent=5 // pred_check
        _
      $region10: #{nce_criterion.1} parent=5 // pred_check_branch
        %68 = sbr.rel (%p65) target = $region12
      $region11: #{nce_criterion.1} parent=5 // pred_region
        %s69 = ssub.s32 %s8, 1
      $region12: #{nce_criterion.1} parent=5 // pred_fallthru
        _
      %p70 = scmp.lt.s32.totalorder %s8, 3
      // Predicated region
      $region13: #{nce_criterion.1} parent=5 // pred_check
        %p71 = pneg %p70
      $region14: #{nce_criterion.1} parent=5 // pred_check_branch
        %73 = sbr.rel (%p71) target = $region16
      $region15: #{nce_criterion.1} parent=5 // pred_region
        // Predicated region
        $region17: #{nce_criterion.1} parent=15 // pred_check
          %p74 = pneg %p28
        $region18: #{nce_criterion.1} parent=15 // pred_check_branch
          %76 = sbr.rel (%p74) target = $region20
        $region19: #{nce_criterion.1} parent=15 // pred_region
          %p77 = scmp.lt.s32.totalorder %s8, 2
          %s78 = scalar_select %p77, %s8, 2
          %s79 = smul.addr %s78, 17
          %s80 = smul.addr %s79, 8
          %s81 = scalar_lea.vmem %s0, %s80
        $region20: #{nce_criterion.1} parent=15 // pred_fallthru
          _
      $region16: #{nce_criterion.1} parent=5 // pred_fallthru
        _
      %p82 = scmp.le.s32.totalorder 1, %s8
      %p83 = scmp.lt.s32.totalorder %s8, 4
      %p84 = pnand %p82, %p83
      %p85 = pneg %p84
      // Predicated region
      $region21: #{nce_criterion.1} parent=5 // pred_check
        _
      $region22: #{nce_criterion.1} parent=5 // pred_check_branch
        %87 = sbr.rel (%p84) target = $region24
      $region23: #{nce_criterion.1} parent=5 // pred_region
        %s88 = ssub.s32 %s8, 1
        %p89 = scmp.lt.s32.totalorder %s13, 2
        %s90 = scalar_select %p89, %s13, 2
        %s91 = smul.addr %s90, 17
        %s92 = smul.addr %s91, 8
        %s93 = scalar_lea.vmem %s0, %s92
        %p94 = pneg %p34
        %p95 = pneg %p31
        %p96 = pneg %p55
        %p97 = pneg %p52
        %p98 = scmp.lt.s32.totalorder %s13, 2
        %s99 = scalar_select %p98, %s13, 2
        %s100 = smul.addr %s99, 17
        %s101 = smul.addr %s100, 8
        %s102 = scalar_lea.vmem %s0, %s101
        %p103 = scmp.eq.s32.totalorder %s13, 0
        // Predicated region
        $region25: #{nce_criterion.1} parent=23 // pred_check
          %p104 = pneg %p103
        $region26: #{nce_criterion.1} parent=23 // pred_check_branch
          %106 = sbr.rel (%p104) target = $region28
        $region27: #{nce_criterion.1} parent=23 // pred_region
          %107 = vst [vmem:[#allocation2] sm:$0xff] 0.0
          %108 = vst [vmem:[#allocation2 + $0x8] sm:$0xff] 0.0
          %v109 = vlaneseq
          %vm110 = vcmp.ge.s32.totalorder %v109, 0
          %vm111 = vcmp.lt.s32.totalorder %v109, 128
          %vm112 = vmand %vm110, %vm111
          %113 = vst.msk [vmem:[#allocation2 + $0x10] sm:$0x1] %vm112, 0.0
          %vm114 = vcmask 0
          %115 = vst.msk [vmem:[#allocation3] sm:$0x1] %vm114, 0.0
        $region28: #{nce_criterion.1} parent=23 // pred_fallthru
          _
        %p116 = scmp.ne.s32.totalorder %s13, 2
        // Predicated region
        $region29: #{nce_criterion.1} parent=23 // pred_check
          %p117 = pneg %p116
        $region30: #{nce_criterion.1} parent=23 // pred_check_branch
          %119 = sbr.rel (%p117) target = $region32
        $region31: #{nce_criterion.1} parent=23 // pred_region
          %v120 = vld [vmem:[%s102] sm:$0xff]
          %v121 = vld [vmem:[%s102 + $0x8] sm:$0xff]
          %v122 = vld [vmem:[%s102 + $0x10] sm:$0xff]
          %v123 = vld [vmem:[%s102 + $0x18] sm:$0xff]
          %v124 = vld [vmem:[%s102 + $0x20] sm:$0xff]
          %v125 = vld [vmem:[%s102 + $0x28] sm:$0xff]
          %v126 = vld [vmem:[%s102 + $0x30] sm:$0xff]
          %v127 = vld [vmem:[%s102 + $0x38] sm:$0xff]
          %v128 = vld [vmem:[%s102 + $0x40] sm:$0xff]
          %v129 = vld [vmem:[%s102 + $0x48] sm:$0xff]
          %v130 = vld [vmem:[%s102 + $0x50] sm:$0xff]
          %v131 = vld [vmem:[%s102 + $0x58] sm:$0xff]
          %v132 = vld [vmem:[%s102 + $0x60] sm:$0xff]
          %v133 = vld [vmem:[%s102 + $0x68] sm:$0xff]
          %v134 = vld [vmem:[%s102 + $0x70] sm:$0xff]
          %v135 = vld [vmem:[%s102 + $0x78] sm:$0xff]
          %v136 = vld [vmem:[%s102 + $0x80] sm:$0xff]
          %v137 = vlaneseq
          %v138 = vand.u32 %v137, 127
          %v139 = vadd.s32 %v138, 128
          %v140 = vadd.s32 %v138, 256
          %v141 = vadd.s32 %v138, 384
          %v142 = vadd.s32 %v138, 512
          %v143 = vadd.s32 %v138, 640
          %v144 = vadd.s32 %v138, 768
          %v145 = vadd.s32 %v138, 896
          %v146 = vadd.s32 %v138, 1024
          %v147 = vadd.s32 %v138, 1152
          %v148 = vadd.s32 %v138, 1280
          %v149 = vadd.s32 %v138, 1408
          %v150 = vadd.s32 %v138, 1536
          %v151 = vadd.s32 %v138, 1664
          %v152 = vadd.s32 %v138, 1792
          %v153 = vadd.s32 %v138, 1920
          %v154 = vadd.s32 %v138, 2048
          %vm155 = vcmp.lt.s32.totalorder %v138, 0
          %v156 = vsub.s32 0, %v138
          %v157 = vsel %vm155, %v156, %v138
          %v158 = vmul.u32.u64.compose %v157, 4042322161
          %v159 = vextract.low.u32 %v158
          %v160 = vextract.high.u32 %v158
          %v161 = vshrl.u32 %v160, 4
          %v162 = vmul.u32 %v161, 17
          %v163 = vsub.s32 %v157, %v162
          %v164 = vsub.s32 0, %v163
          %v165 = vsel %vm155, %v164, %v163
          %vm166 = vcmp.lt.s32.totalorder %v139, 0
          %v167 = vsub.s32 0, %v139
          %v168 = vsel %vm166, %v167, %v139
          %v169 = vmul.u32.u64.compose %v168, 4042322161
          %v170 = vextract.low.u32 %v169
          %v171 = vextract.high.u32 %v169
          %v172 = vshrl.u32 %v171, 4
          %v173 = vmul.u32 %v172, 17
          %v174 = vsub.s32 %v168, %v173
          %v175 = vsub.s32 0, %v174
          %v176 = vsel %vm166, %v175, %v174
          %vm177 = vcmp.lt.s32.totalorder %v140, 0
          %v178 = vsub.s32 0, %v140
          %v179 = vsel %vm177, %v178, %v140
          %v180 = vmul.u32.u64.compose %v179, 4042322161
          %v181 = vextract.low.u32 %v180
          %v182 = vextract.high.u32 %v180
          %v183 = vshrl.u32 %v182, 4
          %v184 = vmul.u32 %v183, 17
          %v185 = vsub.s32 %v179, %v184
          %v186 = vsub.s32 0, %v185
          %v187 = vsel %vm177, %v186, %v185
          %vm188 = vcmp.lt.s32.totalorder %v141, 0
          %v189 = vsub.s32 0, %v141
          %v190 = vsel %vm188, %v189, %v141
          %v191 = vmul.u32.u64.compose %v190, 4042322161
          %v192 = vextract.low.u32 %v191
          %v193 = vextract.high.u32 %v191
          %v194 = vshrl.u32 %v193, 4
          %v195 = vmul.u32 %v194, 17
          %v196 = vsub.s32 %v190, %v195
          %v197 = vsub.s32 0, %v196
          %v198 = vsel %vm188, %v197, %v196
          %vm199 = vcmp.lt.s32.totalorder %v142, 0
          %v200 = vsub.s32 0, %v142
          %v201 = vsel %vm199, %v200, %v142
          %v202 = vmul.u32.u64.compose %v201, 4042322161
          %v203 = vextract.low.u32 %v202
          %v204 = vextract.high.u32 %v202
          %v205 = vshrl.u32 %v204, 4
          %v206 = vmul.u32 %v205, 17
          %v207 = vsub.s32 %v201, %v206
          %v208 = vsub.s32 0, %v207
          %v209 = vsel %vm199, %v208, %v207
          %vm210 = vcmp.lt.s32.totalorder %v143, 0
          %v211 = vsub.s32 0, %v143
          %v212 = vsel %vm210, %v211, %v143
          %v213 = vmul.u32.u64.compose %v212, 4042322161
          %v214 = vextract.low.u32 %v213
          %v215 = vextract.high.u32 %v213
          %v216 = vshrl.u32 %v215, 4
          %v217 = vmul.u32 %v216, 17
          %v218 = vsub.s32 %v212, %v217
          %v219 = vsub.s32 0, %v218
          %v220 = vsel %vm210, %v219, %v218
          %vm221 = vcmp.lt.s32.totalorder %v144, 0
          %v222 = vsub.s32 0, %v144
          %v223 = vsel %vm221, %v222, %v144
          %v224 = vmul.u32.u64.compose %v223, 4042322161
          %v225 = vextract.low.u32 %v224
          %v226 = vextract.high.u32 %v224
          %v227 = vshrl.u32 %v226, 4
          %v228 = vmul.u32 %v227, 17
          %v229 = vsub.s32 %v223, %v228
          %v230 = vsub.s32 0, %v229
          %v231 = vsel %vm221, %v230, %v229
          %vm232 = vcmp.lt.s32.totalorder %v145, 0
          %v233 = vsub.s32 0, %v145
          %v234 = vsel %vm232, %v233, %v145
          %v235 = vmul.u32.u64.compose %v234, 4042322161
          %v236 = vextract.low.u32 %v235
          %v237 = vextract.high.u32 %v235
          %v238 = vshrl.u32 %v237, 4
          %v239 = vmul.u32 %v238, 17
          %v240 = vsub.s32 %v234, %v239
          %v241 = vsub.s32 0, %v240
          %v242 = vsel %vm232, %v241, %v240
          %vm243 = vcmp.lt.s32.totalorder %v146, 0
          %v244 = vsub.s32 0, %v146
          %v245 = vsel %vm243, %v244, %v146
          %v246 = vmul.u32.u64.compose %v245, 4042322161
          %v247 = vextract.low.u32 %v246
          %v248 = vextract.high.u32 %v246
          %v249 = vshrl.u32 %v248, 4
          %v250 = vmul.u32 %v249, 17
          %v251 = vsub.s32 %v245, %v250
          %v252 = vsub.s32 0, %v251
          %v253 = vsel %vm243, %v252, %v251
          %vm254 = vcmp.lt.s32.totalorder %v147, 0
          %v255 = vsub.s32 0, %v147
          %v256 = vsel %vm254, %v255, %v147
          %v257 = vmul.u32.u64.compose %v256, 4042322161
          %v258 = vextract.low.u32 %v257
          %v259 = vextract.high.u32 %v257
          %v260 = vshrl.u32 %v259, 4
          %v261 = vmul.u32 %v260, 17
          %v262 = vsub.s32 %v256, %v261
          %v263 = vsub.s32 0, %v262
          %v264 = vsel %vm254, %v263, %v262
          %vm265 = vcmp.lt.s32.totalorder %v148, 0
          %v266 = vsub.s32 0, %v148
          %v267 = vsel %vm265, %v266, %v148
          %v268 = vmul.u32.u64.compose %v267, 4042322161
          %v269 = vextract.low.u32 %v268
          %v270 = vextract.high.u32 %v268
          %v271 = vshrl.u32 %v270, 4
          %v272 = vmul.u32 %v271, 17
          %v273 = vsub.s32 %v267, %v272
          %v274 = vsub.s32 0, %v273
          %v275 = vsel %vm265, %v274, %v273
          %vm276 = vcmp.lt.s32.totalorder %v149, 0
          %v277 = vsub.s32 0, %v149
          %v278 = vsel %vm276, %v277, %v149
          %v279 = vmul.u32.u64.compose %v278, 4042322161
          %v280 = vextract.low.u32 %v279
          %v281 = vextract.high.u32 %v279
          %v282 = vshrl.u32 %v281, 4
          %v283 = vmul.u32 %v282, 17
          %v284 = vsub.s32 %v278, %v283
          %v285 = vsub.s32 0, %v284
          %v286 = vsel %vm276, %v285, %v284
          %vm287 = vcmp.lt.s32.totalorder %v150, 0
          %v288 = vsub.s32 0, %v150
          %v289 = vsel %vm287, %v288, %v150
          %v290 = vmul.u32.u64.compose %v289, 4042322161
          %v291 = vextract.low.u32 %v290
          %v292 = vextract.high.u32 %v290
          %v293 = vshrl.u32 %v292, 4
          %v294 = vmul.u32 %v293, 17
          %v295 = vsub.s32 %v289, %v294
          %v296 = vsub.s32 0, %v295
          %v297 = vsel %vm287, %v296, %v295
          %vm298 = vcmp.lt.s32.totalorder %v151, 0
          %v299 = vsub.s32 0, %v151
          %v300 = vsel %vm298, %v299, %v151
          %v301 = vmul.u32.u64.compose %v300, 4042322161
          %v302 = vextract.low.u32 %v301
          %v303 = vextract.high.u32 %v301
          %v304 = vshrl.u32 %v303, 4
          %v305 = vmul.u32 %v304, 17
          %v306 = vsub.s32 %v300, %v305
          %v307 = vsub.s32 0, %v306
          %v308 = vsel %vm298, %v307, %v306
          %vm309 = vcmp.lt.s32.totalorder %v152, 0
          %v310 = vsub.s32 0, %v152
          %v311 = vsel %vm309, %v310, %v152
          %v312 = vmul.u32.u64.compose %v311, 4042322161
          %v313 = vextract.low.u32 %v312
          %v314 = vextract.high.u32 %v312
          %v315 = vshrl.u32 %v314, 4
          %v316 = vmul.u32 %v315, 17
          %v317 = vsub.s32 %v311, %v316
          %v318 = vsub.s32 0, %v317
          %v319 = vsel %vm309, %v318, %v317
          %vm320 = vcmp.lt.s32.totalorder %v153, 0
          %v321 = vsub.s32 0, %v153
          %v322 = vsel %vm320, %v321, %v153
          %v323 = vmul.u32.u64.compose %v322, 4042322161
          %v324 = vextract.low.u32 %v323
          %v325 = vextract.high.u32 %v323
          %v326 = vshrl.u32 %v325, 4
          %v327 = vmul.u32 %v326, 17
          %v328 = vsub.s32 %v322, %v327
          %v329 = vsub.s32 0, %v328
          %v330 = vsel %vm320, %v329, %v328
          %vm331 = vcmp.lt.s32.totalorder %v154, 0
          %v332 = vsub.s32 0, %v154
          %v333 = vsel %vm331, %v332, %v154
          %v334 = vmul.u32.u64.compose %v333, 4042322161
          %v335 = vextract.low.u32 %v334
          %v336 = vextract.high.u32 %v334
          %v337 = vshrl.u32 %v336, 4
          %v338 = vmul.u32 %v337, 17
          %v339 = vsub.s32 %v333, %v338
          %v340 = vsub.s32 0, %v339
          %v341 = vsel %vm331, %v340, %v339
          %vm342 = vcmp.ne.s32.totalorder %v165, 0
          %vm343 = vcmp.ne.s32.totalorder %v176, 0
          %vm344 = vcmp.ne.s32.totalorder %v187, 0
          %vm345 = vcmp.ne.s32.totalorder %v198, 0
          %vm346 = vcmp.ne.s32.totalorder %v209, 0
          %vm347 = vcmp.ne.s32.totalorder %v220, 0
          %vm348 = vcmp.ne.s32.totalorder %v231, 0
          %vm349 = vcmp.ne.s32.totalorder %v242, 0
          %vm350 = vcmp.ne.s32.totalorder %v253, 0
          %vm351 = vcmp.ne.s32.totalorder %v264, 0
          %vm352 = vcmp.ne.s32.totalorder %v275, 0
          %vm353 = vcmp.ne.s32.totalorder %v286, 0
          %vm354 = vcmp.ne.s32.totalorder %v297, 0
          %vm355 = vcmp.ne.s32.totalorder %v308, 0
          %vm356 = vcmp.ne.s32.totalorder %v319, 0
          %vm357 = vcmp.ne.s32.totalorder %v330, 0
          %vm358 = vcmp.ne.s32.totalorder %v341, 0
          %vm359 = vcmp.lt.s32.totalorder %v165, 0
          %vm360 = vcmp.lt.s32.totalorder %v176, 0
          %vm361 = vcmp.lt.s32.totalorder %v187, 0
          %vm362 = vcmp.lt.s32.totalorder %v198, 0
          %vm363 = vcmp.lt.s32.totalorder %v209, 0
          %vm364 = vcmp.lt.s32.totalorder %v220, 0
          %vm365 = vcmp.lt.s32.totalorder %v231, 0
          %vm366 = vcmp.lt.s32.totalorder %v242, 0
          %vm367 = vcmp.lt.s32.totalorder %v253, 0
          %vm368 = vcmp.lt.s32.totalorder %v264, 0
          %vm369 = vcmp.lt.s32.totalorder %v275, 0
          %vm370 = vcmp.lt.s32.totalorder %v286, 0
          %vm371 = vcmp.lt.s32.totalorder %v297, 0
          %vm372 = vcmp.lt.s32.totalorder %v308, 0
          %vm373 = vcmp.lt.s32.totalorder %v319, 0
          %vm374 = vcmp.lt.s32.totalorder %v330, 0
          %vm375 = vcmp.lt.s32.totalorder %v341, 0
          %vm376 = vmand %vm359, %vm342
          %vm377 = vmand %vm360, %vm343
          %vm378 = vmand %vm361, %vm344
          %vm379 = vmand %vm362, %vm345
          %vm380 = vmand %vm363, %vm346
          %vm381 = vmand %vm364, %vm347
          %vm382 = vmand %vm365, %vm348
          %vm383 = vmand %vm366, %vm349
          %vm384 = vmand %vm367, %vm350
          %vm385 = vmand %vm368, %vm351
          %vm386 = vmand %vm369, %vm352
          %vm387 = vmand %vm370, %vm353
          %vm388 = vmand %vm371, %vm354
          %vm389 = vmand %vm372, %vm355
          %vm390 = vmand %vm373, %vm356
          %vm391 = vmand %vm374, %vm357
          %vm392 = vmand %vm375, %vm358
          %v393 = vadd.s32 %v165, 17
          %v394 = vadd.s32 %v176, 17
          %v395 = vadd.s32 %v187, 17
          %v396 = vadd.s32 %v198, 17
          %v397 = vadd.s32 %v209, 17
          %v398 = vadd.s32 %v220, 17
          %v399 = vadd.s32 %v231, 17
          %v400 = vadd.s32 %v242, 17
          %v401 = vadd.s32 %v253, 17
          %v402 = vadd.s32 %v264, 17
          %v403 = vadd.s32 %v275, 17
          %v404 = vadd.s32 %v286, 17
          %v405 = vadd.s32 %v297, 17
          %v406 = vadd.s32 %v308, 17
          %v407 = vadd.s32 %v319, 17
          %v408 = vadd.s32 %v330, 17
          %v409 = vadd.s32 %v341, 17
          %v410 = vsel %vm376, %v393, %v165
          %v411 = vsel %vm377, %v394, %v176
          %v412 = vsel %vm378, %v395, %v187
          %v413 = vsel %vm379, %v396, %v198
          %v414 = vsel %vm380, %v397, %v209
          %v415 = vsel %vm381, %v398, %v220
          %v416 = vsel %vm382, %v399, %v231
          %v417 = vsel %vm383, %v400, %v242
          %v418 = vsel %vm384, %v401, %v253
          %v419 = vsel %vm385, %v402, %v264
          %v420 = vsel %vm386, %v403, %v275
          %v421 = vsel %vm387, %v404, %v286
          %v422 = vsel %vm388, %v405, %v297
          %v423 = vsel %vm389, %v406, %v308
          %v424 = vsel %vm390, %v407, %v319
          %v425 = vsel %vm391, %v408, %v330
          %v426 = vsel %vm392, %v409, %v341
          %vm427 = vcmp.eq.s32.totalorder %v410, 0
          %vm428 = vcmp.eq.s32.totalorder %v411, 0
          %vm429 = vcmp.eq.s32.totalorder %v412, 0
          %vm430 = vcmp.eq.s32.totalorder %v413, 0
          %vm431 = vcmp.eq.s32.totalorder %v414, 0
          %vm432 = vcmp.eq.s32.totalorder %v415, 0
          %vm433 = vcmp.eq.s32.totalorder %v416, 0
          %vm434 = vcmp.eq.s32.totalorder %v417, 0
          %vm435 = vcmp.eq.s32.totalorder %v418, 0
          %vm436 = vcmp.eq.s32.totalorder %v419, 0
          %vm437 = vcmp.eq.s32.totalorder %v420, 0
          %vm438 = vcmp.eq.s32.totalorder %v421, 0
          %vm439 = vcmp.eq.s32.totalorder %v422, 0
          %vm440 = vcmp.eq.s32.totalorder %v423, 0
          %vm441 = vcmp.eq.s32.totalorder %v424, 0
          %vm442 = vcmp.eq.s32.totalorder %v425, 0
          %vm443 = vcmp.eq.s32.totalorder %v426, 0
          %v444 = vsel %vm427, %v120, 1.0
          %v445 = vsel %vm428, %v121, 1.0
          %v446 = vsel %vm429, %v122, 1.0
          %v447 = vsel %vm430, %v123, 1.0
          %v448 = vsel %vm431, %v124, 1.0
          %v449 = vsel %vm432, %v125, 1.0
          %v450 = vsel %vm433, %v126, 1.0
          %v451 = vsel %vm434, %v127, 1.0
          %v452 = vsel %vm435, %v128, 1.0
          %v453 = vsel %vm436, %v129, 1.0
          %v454 = vsel %vm437, %v130, 1.0
          %v455 = vsel %vm438, %v131, 1.0
          %v456 = vsel %vm439, %v132, 1.0
          %v457 = vsel %vm440, %v133, 1.0
          %v458 = vsel %vm441, %v134, 1.0
          %v459 = vsel %vm442, %v135, 1.0
          %v460 = vsel %vm443, %v136, 1.0
          %v461 = vlog2.pop %v444
          %v462 = vmul.f32 %v461, 0.6931472
          %v463 = vlog2.pop %v445
          %v464 = vmul.f32 %v463, 0.6931472
          %v465 = vlog2.pop %v446
          %v466 = vmul.f32 %v465, 0.6931472
          %v467 = vlog2.pop %v447
          %v468 = vmul.f32 %v467, 0.6931472
          %v469 = vlog2.pop %v448
          %v470 = vmul.f32 %v469, 0.6931472
          %v471 = vlog2.pop %v449
          %v472 = vmul.f32 %v471, 0.6931472
          %v473 = vlog2.pop %v450
          %v474 = vmul.f32 %v473, 0.6931472
          %v475 = vlog2.pop %v451
          %v476 = vmul.f32 %v475, 0.6931472
          %v477 = vlog2.pop %v452
          %v478 = vmul.f32 %v477, 0.6931472
          %v479 = vlog2.pop %v453
          %v480 = vmul.f32 %v479, 0.6931472
          %v481 = vlog2.pop %v454
          %v482 = vmul.f32 %v481, 0.6931472
          %v483 = vlog2.pop %v455
          %v484 = vmul.f32 %v483, 0.6931472
          %v485 = vlog2.pop %v456
          %v486 = vmul.f32 %v485, 0.6931472
          %v487 = vlog2.pop %v457
          %v488 = vmul.f32 %v487, 0.6931472
          %v489 = vlog2.pop %v458
          %v490 = vmul.f32 %v489, 0.6931472
          %v491 = vlog2.pop %v459
          %v492 = vmul.f32 %v491, 0.6931472
          %v493 = vlog2.pop %v460
          %v494 = vmul.f32 %v493, 0.6931472
          %v495 = vadd.f32 %v120, 0.0160001
          %v496 = vadd.f32 %v121, 0.0160001
          %v497 = vadd.f32 %v122, 0.0160001
          %v498 = vadd.f32 %v123, 0.0160001
          %v499 = vadd.f32 %v124, 0.0160001
          %v500 = vadd.f32 %v125, 0.0160001
          %v501 = vadd.f32 %v126, 0.0160001
          %v502 = vadd.f32 %v127, 0.0160001
          %v503 = vadd.f32 %v128, 0.0160001
          %v504 = vadd.f32 %v129, 0.0160001
          %v505 = vadd.f32 %v130, 0.0160001
          %v506 = vadd.f32 %v131, 0.0160001
          %v507 = vadd.f32 %v132, 0.0160001
          %v508 = vadd.f32 %v133, 0.0160001
          %v509 = vadd.f32 %v134, 0.0160001
          %v510 = vadd.f32 %v135, 0.0160001
          %v511 = vadd.f32 %v136, 0.0160001
          %v512 = vlog2.pop %v495
          %v513 = vmul.f32 %v512, 0.6931472
          %v514 = vlog2.pop %v496
          %v515 = vmul.f32 %v514, 0.6931472
          %v516 = vlog2.pop %v497
          %v517 = vmul.f32 %v516, 0.6931472
          %v518 = vlog2.pop %v498
          %v519 = vmul.f32 %v518, 0.6931472
          %v520 = vlog2.pop %v499
          %v521 = vmul.f32 %v520, 0.6931472
          %v522 = vlog2.pop %v500
          %v523 = vmul.f32 %v522, 0.6931472
          %v524 = vlog2.pop %v501
          %v525 = vmul.f32 %v524, 0.6931472
          %v526 = vlog2.pop %v502
          %v527 = vmul.f32 %v526, 0.6931472
          %v528 = vlog2.pop %v503
          %v529 = vmul.f32 %v528, 0.6931472
          %v530 = vlog2.pop %v504
          %v531 = vmul.f32 %v530, 0.6931472
          %v532 = vlog2.pop %v505
          %v533 = vmul.f32 %v532, 0.6931472
          %v534 = vlog2.pop %v506
          %v535 = vmul.f32 %v534, 0.6931472
          %v536 = vlog2.pop %v507
          %v537 = vmul.f32 %v536, 0.6931472
          %v538 = vlog2.pop %v508
          %v539 = vmul.f32 %v538, 0.6931472
          %v540 = vlog2.pop %v509
          %v541 = vmul.f32 %v540, 0.6931472
          %v542 = vlog2.pop %v510
          %v543 = vmul.f32 %v542, 0.6931472
          %v544 = vlog2.pop %v511
          %v545 = vmul.f32 %v544, 0.6931472
          %v546 = vsub.f32 %v462, %v513
          %v547 = vsub.f32 %v464, %v515
          %v548 = vsub.f32 %v466, %v517
          %v549 = vsub.f32 %v468, %v519
          %v550 = vsub.f32 %v470, %v521
          %v551 = vsub.f32 %v472, %v523
          %v552 = vsub.f32 %v474, %v525
          %v553 = vsub.f32 %v476, %v527
          %v554 = vsub.f32 %v478, %v529
          %v555 = vsub.f32 %v480, %v531
          %v556 = vsub.f32 %v482, %v533
          %v557 = vsub.f32 %v484, %v535
          %v558 = vsub.f32 %v486, %v537
          %v559 = vsub.f32 %v488, %v539
          %v560 = vsub.f32 %v490, %v541
          %v561 = vsub.f32 %v492, %v543
          %v562 = vsub.f32 %v494, %v545
          %v563 = vld [vmem:[#allocation2] sm:$0xff]
          %v564 = vld [vmem:[#allocation2 + $0x8] sm:$0xff]
          %v565 = vld [vmem:[#allocation2 + $0x10] sm:$0x1]
          %v566 = vrot.slane %v546, 4
          %v567 = vadd.f32 %v546, %v566
          %v568 = vrot.slane %v567, 2
          %v569 = vadd.f32 %v567, %v568
          %v570 = vrot.slane %v569, 1
          %v571 = vadd.f32 %v569, %v570
          %v572 = vrot.slane %v547, 4
          %v573 = vadd.f32 %v547, %v572
          %v574 = vrot.slane %v573, 2
          %v575 = vadd.f32 %v573, %v574
          %v576 = vrot.slane %v575, 1
          %v577 = vadd.f32 %v575, %v576
          %v578 = vrot.slane %v548, 4
          %v579 = vadd.f32 %v548, %v578
          %v580 = vrot.slane %v579, 2
          %v581 = vadd.f32 %v579, %v580
          %v582 = vrot.slane %v581, 1
          %v583 = vadd.f32 %v581, %v582
          %v584 = vrot.slane %v549, 4
          %v585 = vadd.f32 %v549, %v584
          %v586 = vrot.slane %v585, 2
          %v587 = vadd.f32 %v585, %v586
          %v588 = vrot.slane %v587, 1
          %v589 = vadd.f32 %v587, %v588
          %v590 = vrot.slane %v550, 4
          %v591 = vadd.f32 %v550, %v590
          %v592 = vrot.slane %v591, 2
          %v593 = vadd.f32 %v591, %v592
          %v594 = vrot.slane %v593, 1
          %v595 = vadd.f32 %v593, %v594
          %v596 = vrot.slane %v551, 4
          %v597 = vadd.f32 %v551, %v596
          %v598 = vrot.slane %v597, 2
          %v599 = vadd.f32 %v597, %v598
          %v600 = vrot.slane %v599, 1
          %v601 = vadd.f32 %v599, %v600
          %v602 = vrot.slane %v552, 4
          %v603 = vadd.f32 %v552, %v602
          %v604 = vrot.slane %v603, 2
          %v605 = vadd.f32 %v603, %v604
          %v606 = vrot.slane %v605, 1
          %v607 = vadd.f32 %v605, %v606
          %v608 = vrot.slane %v553, 4
          %v609 = vadd.f32 %v553, %v608
          %v610 = vrot.slane %v609, 2
          %v611 = vadd.f32 %v609, %v610
          %v612 = vrot.slane %v611, 1
          %v613 = vadd.f32 %v611, %v612
          %v614 = vrot.slane %v554, 4
          %v615 = vadd.f32 %v554, %v614
          %v616 = vrot.slane %v615, 2
          %v617 = vadd.f32 %v615, %v616
          %v618 = vrot.slane %v617, 1
          %v619 = vadd.f32 %v617, %v618
          %v620 = vrot.slane %v555, 4
          %v621 = vadd.f32 %v555, %v620
          %v622 = vrot.slane %v621, 2
          %v623 = vadd.f32 %v621, %v622
          %v624 = vrot.slane %v623, 1
          %v625 = vadd.f32 %v623, %v624
          %v626 = vrot.slane %v556, 4
          %v627 = vadd.f32 %v556, %v626
          %v628 = vrot.slane %v627, 2
          %v629 = vadd.f32 %v627, %v628
          %v630 = vrot.slane %v629, 1
          %v631 = vadd.f32 %v629, %v630
          %v632 = vrot.slane %v557, 4
          %v633 = vadd.f32 %v557, %v632
          %v634 = vrot.slane %v633, 2
          %v635 = vadd.f32 %v633, %v634
          %v636 = vrot.slane %v635, 1
          %v637 = vadd.f32 %v635, %v636
          %v638 = vrot.slane %v558, 4
          %v639 = vadd.f32 %v558, %v638
          %v640 = vrot.slane %v639, 2
          %v641 = vadd.f32 %v639, %v640
          %v642 = vrot.slane %v641, 1
          %v643 = vadd.f32 %v641, %v642
          %v644 = vrot.slane %v559, 4
          %v645 = vadd.f32 %v559, %v644
          %v646 = vrot.slane %v645, 2
          %v647 = vadd.f32 %v645, %v646
          %v648 = vrot.slane %v647, 1
          %v649 = vadd.f32 %v647, %v648
          %v650 = vrot.slane %v560, 4
          %v651 = vadd.f32 %v560, %v650
          %v652 = vrot.slane %v651, 2
          %v653 = vadd.f32 %v651, %v652
          %v654 = vrot.slane %v653, 1
          %v655 = vadd.f32 %v653, %v654
          %v656 = vrot.slane %v561, 4
          %v657 = vadd.f32 %v561, %v656
          %v658 = vrot.slane %v657, 2
          %v659 = vadd.f32 %v657, %v658
          %v660 = vrot.slane %v659, 1
          %v661 = vadd.f32 %v659, %v660
          %v662 = vrot.slane %v562, 4
          %v663 = vadd.f32 %v562, %v662
          %v664 = vrot.slane %v663, 2
          %v665 = vadd.f32 %v663, %v664
          %v666 = vrot.slane %v665, 1
          %v667 = vadd.f32 %v665, %v666
          %v685 = vcombine.low %v571, %v577
          %v686 = vcombine.low %v583, %v589
          %v687 = vcombine.low %v595, %v601
          %v688 = vcombine.low %v607, %v613
          %v690 = vunpack.c.l.s4 1966171168
          %v691 = vunpack.c.0.s8 %v690
          %v692 = vlaneseq
          %v693 = vshrl.u32 %v692, 7
          %v694 = vsub.s32 %v691, %v693
          %v695 = vrot.slane %v685, %v694
          %v697 = vunpack.c.l.s4 1966171168
          %v698 = vunpack.c.0.s8 %v697
          %v699 = vlaneseq
          %v700 = vshrl.u32 %v699, 7
          %v701 = vsub.s32 %v698, %v700
          %v702 = vrot.slane %v686, %v701
          %v704 = vunpack.c.l.s4 1966171168
          %v705 = vunpack.c.0.s8 %v704
          %v706 = vlaneseq
          %v707 = vshrl.u32 %v706, 7
          %v708 = vsub.s32 %v705, %v707
          %v709 = vrot.slane %v687, %v708
          %v711 = vunpack.c.l.s4 1966171168
          %v712 = vunpack.c.0.s8 %v711
          %v713 = vlaneseq
          %v714 = vshrl.u32 %v713, 7
          %v715 = vsub.s32 %v712, %v714
          %v716 = vrot.slane %v688, %v715
          %v717 = vcombine.low %v695, %v702
          %v718 = vcombine.low %v709, %v716
          %v720 = vunpack.c.l.s4 1966171168
          %v721 = vunpack.c.0.s8 %v720
          %v722 = vlaneseq
          %v723 = vshrl.u32 %v722, 7
          %v724 = vsub.s32 %v721, %v723
          %v725 = vrot.slane %v717, %v724
          %v727 = vunpack.c.l.s4 1966171168
          %v728 = vunpack.c.0.s8 %v727
          %v729 = vlaneseq
          %v730 = vshrl.u32 %v729, 7
          %v731 = vsub.s32 %v728, %v730
          %v732 = vrot.slane %v718, %v731
          %v733 = vcombine.low %v725, %v732
          %v734 = vcombine.low %v619, %v625
          %v735 = vcombine.low %v631, %v637
          %v736 = vcombine.low %v643, %v649
          %v737 = vcombine.low %v655, %v661
          %v739 = vunpack.c.l.s4 1966171168
          %v740 = vunpack.c.0.s8 %v739
          %v741 = vlaneseq
          %v742 = vshrl.u32 %v741, 7
          %v743 = vsub.s32 %v740, %v742
          %v744 = vrot.slane %v734, %v743
          %v746 = vunpack.c.l.s4 1966171168
          %v747 = vunpack.c.0.s8 %v746
          %v748 = vlaneseq
          %v749 = vshrl.u32 %v748, 7
          %v750 = vsub.s32 %v747, %v749
          %v751 = vrot.slane %v735, %v750
          %v753 = vunpack.c.l.s4 1966171168
          %v754 = vunpack.c.0.s8 %v753
          %v755 = vlaneseq
          %v756 = vshrl.u32 %v755, 7
          %v757 = vsub.s32 %v754, %v756
          %v758 = vrot.slane %v736, %v757
          %v760 = vunpack.c.l.s4 1966171168
          %v761 = vunpack.c.0.s8 %v760
          %v762 = vlaneseq
          %v763 = vshrl.u32 %v762, 7
          %v764 = vsub.s32 %v761, %v763
          %v765 = vrot.slane %v737, %v764
          %v766 = vcombine.low %v744, %v751
          %v767 = vcombine.low %v758, %v765
          %v769 = vunpack.c.l.s4 1966171168
          %v770 = vunpack.c.0.s8 %v769
          %v771 = vlaneseq
          %v772 = vshrl.u32 %v771, 7
          %v773 = vsub.s32 %v770, %v772
          %v774 = vrot.slane %v766, %v773
          %v776 = vunpack.c.l.s4 1966171168
          %v777 = vunpack.c.0.s8 %v776
          %v778 = vlaneseq
          %v779 = vshrl.u32 %v778, 7
          %v780 = vsub.s32 %v777, %v779
          %v781 = vrot.slane %v767, %v780
          %v782 = vcombine.low %v774, %v781
          %v784 = vunpack.c.l.s4 1966171168
          %v785 = vunpack.c.0.s8 %v784
          %v786 = vlaneseq
          %v787 = vshrl.u32 %v786, 7
          %v788 = vsub.s32 %v785, %v787
          %v789 = vrot.slane %v667, %v788
          %v791 = vunpack.c.l.s4 1966171168
          %v792 = vunpack.c.0.s8 %v791
          %v793 = vlaneseq
          %v794 = vshrl.u32 %v793, 7
          %v795 = vsub.s32 %v792, %v794
          %v796 = vrot.slane %v789, %v795
          %v800 = vadd.f32 %v563, %v733
          %v801 = vadd.f32 %v564, %v782
          %v802 = vadd.f32 %v565, %v796
          %803 = vst [vmem:[#allocation2] sm:$0xff] %v800
          %804 = vst [vmem:[#allocation2 + $0x8] sm:$0xff] %v801
          %v805 = vlaneseq
          %vm806 = vcmp.ge.s32.totalorder %v805, 0
          %vm807 = vcmp.lt.s32.totalorder %v805, 128
          %vm808 = vmand %vm806, %vm807
          %809 = vst.msk [vmem:[#allocation2 + $0x10] sm:$0x1] %vm808, %v802
        $region32: #{nce_criterion.1} parent=23 // pred_fallthru
          _
        %p810 = scmp.eq.s32.totalorder %s13, 2
        // Predicated region
        $region33: #{nce_criterion.1} parent=23 // pred_check
          %p811 = pneg %p810
        $region34: #{nce_criterion.1} parent=23 // pred_check_branch
          %813 = sbr.rel (%p811) target = $region36
        $region35: #{nce_criterion.1} parent=23 // pred_region
          %v814 = vld [vmem:[%s102] sm:$0xff]
          %v815 = vld [vmem:[%s102 + $0x8] sm:$0xff]
          %v816 = vld [vmem:[%s102 + $0x10] sm:$0xff]
          %v817 = vld [vmem:[%s102 + $0x18] sm:$0xff]
          %v818 = vld [vmem:[%s102 + $0x20] sm:$0xff]
          %v819 = vld [vmem:[%s102 + $0x28] sm:$0xff]
          %v820 = vld [vmem:[%s102 + $0x30] sm:$0xff]
          %v821 = vld [vmem:[%s102 + $0x38] sm:$0xff]
          %v822 = vld [vmem:[%s102 + $0x40] sm:$0xff]
          %v823 = vld [vmem:[%s102 + $0x48] sm:$0xff]
          %v824 = vld [vmem:[%s102 + $0x50] sm:$0xff]
          %v825 = vld [vmem:[%s102 + $0x58] sm:$0xff]
          %v826 = vld [vmem:[%s102 + $0x60] sm:$0xff]
          %v827 = vld [vmem:[%s102 + $0x68] sm:$0xff]
          %v828 = vld [vmem:[%s102 + $0x70] sm:$0xff]
          %v829 = vld [vmem:[%s102 + $0x78] sm:$0xff]
          %v830 = vld [vmem:[%s102 + $0x80] sm:$0xff]
          %v831 = vlaneseq
          %v832 = vand.u32 %v831, 127
          %v833 = vadd.s32 %v832, 128
          %v834 = vadd.s32 %v832, 256
          %v835 = vadd.s32 %v832, 384
          %v836 = vadd.s32 %v832, 512
          %v837 = vadd.s32 %v832, 640
          %v838 = vadd.s32 %v832, 768
          %v839 = vadd.s32 %v832, 896
          %v840 = vadd.s32 %v832, 1024
          %v841 = vadd.s32 %v832, 1152
          %v842 = vadd.s32 %v832, 1280
          %v843 = vadd.s32 %v832, 1408
          %v844 = vadd.s32 %v832, 1536
          %v845 = vadd.s32 %v832, 1664
          %v846 = vadd.s32 %v832, 1792
          %v847 = vadd.s32 %v832, 1920
          %v848 = vadd.s32 %v832, 2048
          %vm849 = vcmp.lt.s32.totalorder %v832, 0
          %v850 = vsub.s32 0, %v832
          %v851 = vsel %vm849, %v850, %v832
          %v852 = vmul.u32.u64.compose %v851, 4042322161
          %v853 = vextract.low.u32 %v852
          %v854 = vextract.high.u32 %v852
          %v855 = vshrl.u32 %v854, 4
          %v856 = vmul.u32 %v855, 17
          %v857 = vsub.s32 %v851, %v856
          %v858 = vsub.s32 0, %v857
          %v859 = vsel %vm849, %v858, %v857
          %vm860 = vcmp.lt.s32.totalorder %v833, 0
          %v861 = vsub.s32 0, %v833
          %v862 = vsel %vm860, %v861, %v833
          %v863 = vmul.u32.u64.compose %v862, 4042322161
          %v864 = vextract.low.u32 %v863
          %v865 = vextract.high.u32 %v863
          %v866 = vshrl.u32 %v865, 4
          %v867 = vmul.u32 %v866, 17
          %v868 = vsub.s32 %v862, %v867
          %v869 = vsub.s32 0, %v868
          %v870 = vsel %vm860, %v869, %v868
          %vm871 = vcmp.lt.s32.totalorder %v834, 0
          %v872 = vsub.s32 0, %v834
          %v873 = vsel %vm871, %v872, %v834
          %v874 = vmul.u32.u64.compose %v873, 4042322161
          %v875 = vextract.low.u32 %v874
          %v876 = vextract.high.u32 %v874
          %v877 = vshrl.u32 %v876, 4
          %v878 = vmul.u32 %v877, 17
          %v879 = vsub.s32 %v873, %v878
          %v880 = vsub.s32 0, %v879
          %v881 = vsel %vm871, %v880, %v879
          %vm882 = vcmp.lt.s32.totalorder %v835, 0
          %v883 = vsub.s32 0, %v835
          %v884 = vsel %vm882, %v883, %v835
          %v885 = vmul.u32.u64.compose %v884, 4042322161
          %v886 = vextract.low.u32 %v885
          %v887 = vextract.high.u32 %v885
          %v888 = vshrl.u32 %v887, 4
          %v889 = vmul.u32 %v888, 17
          %v890 = vsub.s32 %v884, %v889
          %v891 = vsub.s32 0, %v890
          %v892 = vsel %vm882, %v891, %v890
          %vm893 = vcmp.lt.s32.totalorder %v836, 0
          %v894 = vsub.s32 0, %v836
          %v895 = vsel %vm893, %v894, %v836
          %v896 = vmul.u32.u64.compose %v895, 4042322161
          %v897 = vextract.low.u32 %v896
          %v898 = vextract.high.u32 %v896
          %v899 = vshrl.u32 %v898, 4
          %v900 = vmul.u32 %v899, 17
          %v901 = vsub.s32 %v895, %v900
          %v902 = vsub.s32 0, %v901
          %v903 = vsel %vm893, %v902, %v901
          %vm904 = vcmp.lt.s32.totalorder %v837, 0
          %v905 = vsub.s32 0, %v837
          %v906 = vsel %vm904, %v905, %v837
          %v907 = vmul.u32.u64.compose %v906, 4042322161
          %v908 = vextract.low.u32 %v907
          %v909 = vextract.high.u32 %v907
          %v910 = vshrl.u32 %v909, 4
          %v911 = vmul.u32 %v910, 17
          %v912 = vsub.s32 %v906, %v911
          %v913 = vsub.s32 0, %v912
          %v914 = vsel %vm904, %v913, %v912
          %vm915 = vcmp.lt.s32.totalorder %v838, 0
          %v916 = vsub.s32 0, %v838
          %v917 = vsel %vm915, %v916, %v838
          %v918 = vmul.u32.u64.compose %v917, 4042322161
          %v919 = vextract.low.u32 %v918
          %v920 = vextract.high.u32 %v918
          %v921 = vshrl.u32 %v920, 4
          %v922 = vmul.u32 %v921, 17
          %v923 = vsub.s32 %v917, %v922
          %v924 = vsub.s32 0, %v923
          %v925 = vsel %vm915, %v924, %v923
          %vm926 = vcmp.lt.s32.totalorder %v839, 0
          %v927 = vsub.s32 0, %v839
          %v928 = vsel %vm926, %v927, %v839
          %v929 = vmul.u32.u64.compose %v928, 4042322161
          %v930 = vextract.low.u32 %v929
          %v931 = vextract.high.u32 %v929
          %v932 = vshrl.u32 %v931, 4
          %v933 = vmul.u32 %v932, 17
          %v934 = vsub.s32 %v928, %v933
          %v935 = vsub.s32 0, %v934
          %v936 = vsel %vm926, %v935, %v934
          %vm937 = vcmp.lt.s32.totalorder %v840, 0
          %v938 = vsub.s32 0, %v840
          %v939 = vsel %vm937, %v938, %v840
          %v940 = vmul.u32.u64.compose %v939, 4042322161
          %v941 = vextract.low.u32 %v940
          %v942 = vextract.high.u32 %v940
          %v943 = vshrl.u32 %v942, 4
          %v944 = vmul.u32 %v943, 17
          %v945 = vsub.s32 %v939, %v944
          %v946 = vsub.s32 0, %v945
          %v947 = vsel %vm937, %v946, %v945
          %vm948 = vcmp.lt.s32.totalorder %v841, 0
          %v949 = vsub.s32 0, %v841
          %v950 = vsel %vm948, %v949, %v841
          %v951 = vmul.u32.u64.compose %v950, 4042322161
          %v952 = vextract.low.u32 %v951
          %v953 = vextract.high.u32 %v951
          %v954 = vshrl.u32 %v953, 4
          %v955 = vmul.u32 %v954, 17
          %v956 = vsub.s32 %v950, %v955
          %v957 = vsub.s32 0, %v956
          %v958 = vsel %vm948, %v957, %v956
          %vm959 = vcmp.lt.s32.totalorder %v842, 0
          %v960 = vsub.s32 0, %v842
          %v961 = vsel %vm959, %v960, %v842
          %v962 = vmul.u32.u64.compose %v961, 4042322161
          %v963 = vextract.low.u32 %v962
          %v964 = vextract.high.u32 %v962
          %v965 = vshrl.u32 %v964, 4
          %v966 = vmul.u32 %v965, 17
          %v967 = vsub.s32 %v961, %v966
          %v968 = vsub.s32 0, %v967
          %v969 = vsel %vm959, %v968, %v967
          %vm970 = vcmp.lt.s32.totalorder %v843, 0
          %v971 = vsub.s32 0, %v843
          %v972 = vsel %vm970, %v971, %v843
          %v973 = vmul.u32.u64.compose %v972, 4042322161
          %v974 = vextract.low.u32 %v973
          %v975 = vextract.high.u32 %v973
          %v976 = vshrl.u32 %v975, 4
          %v977 = vmul.u32 %v976, 17
          %v978 = vsub.s32 %v972, %v977
          %v979 = vsub.s32 0, %v978
          %v980 = vsel %vm970, %v979, %v978
          %vm981 = vcmp.lt.s32.totalorder %v844, 0
          %v982 = vsub.s32 0, %v844
          %v983 = vsel %vm981, %v982, %v844
          %v984 = vmul.u32.u64.compose %v983, 4042322161
          %v985 = vextract.low.u32 %v984
          %v986 = vextract.high.u32 %v984
          %v987 = vshrl.u32 %v986, 4
          %v988 = vmul.u32 %v987, 17
          %v989 = vsub.s32 %v983, %v988
          %v990 = vsub.s32 0, %v989
          %v991 = vsel %vm981, %v990, %v989
          %vm992 = vcmp.lt.s32.totalorder %v845, 0
          %v993 = vsub.s32 0, %v845
          %v994 = vsel %vm992, %v993, %v845
          %v995 = vmul.u32.u64.compose %v994, 4042322161
          %v996 = vextract.low.u32 %v995
          %v997 = vextract.high.u32 %v995
          %v998 = vshrl.u32 %v997, 4
          %v999 = vmul.u32 %v998, 17
          %v1000 = vsub.s32 %v994, %v999
          %v1001 = vsub.s32 0, %v1000
          %v1002 = vsel %vm992, %v1001, %v1000
          %vm1003 = vcmp.lt.s32.totalorder %v846, 0
          %v1004 = vsub.s32 0, %v846
          %v1005 = vsel %vm1003, %v1004, %v846
          %v1006 = vmul.u32.u64.compose %v1005, 4042322161
          %v1007 = vextract.low.u32 %v1006
          %v1008 = vextract.high.u32 %v1006
          %v1009 = vshrl.u32 %v1008, 4
          %v1010 = vmul.u32 %v1009, 17
          %v1011 = vsub.s32 %v1005, %v1010
          %v1012 = vsub.s32 0, %v1011
          %v1013 = vsel %vm1003, %v1012, %v1011
          %vm1014 = vcmp.lt.s32.totalorder %v847, 0
          %v1015 = vsub.s32 0, %v847
          %v1016 = vsel %vm1014, %v1015, %v847
          %v1017 = vmul.u32.u64.compose %v1016, 4042322161
          %v1018 = vextract.low.u32 %v1017
          %v1019 = vextract.high.u32 %v1017
          %v1020 = vshrl.u32 %v1019, 4
          %v1021 = vmul.u32 %v1020, 17
          %v1022 = vsub.s32 %v1016, %v1021
          %v1023 = vsub.s32 0, %v1022
          %v1024 = vsel %vm1014, %v1023, %v1022
          %vm1025 = vcmp.lt.s32.totalorder %v848, 0
          %v1026 = vsub.s32 0, %v848
          %v1027 = vsel %vm1025, %v1026, %v848
          %v1028 = vmul.u32.u64.compose %v1027, 4042322161
          %v1029 = vextract.low.u32 %v1028
          %v1030 = vextract.high.u32 %v1028
          %v1031 = vshrl.u32 %v1030, 4
          %v1032 = vmul.u32 %v1031, 17
          %v1033 = vsub.s32 %v1027, %v1032
          %v1034 = vsub.s32 0, %v1033
          %v1035 = vsel %vm1025, %v1034, %v1033
          %vm1036 = vcmp.ne.s32.totalorder %v859, 0
          %vm1037 = vcmp.ne.s32.totalorder %v870, 0
          %vm1038 = vcmp.ne.s32.totalorder %v881, 0
          %vm1039 = vcmp.ne.s32.totalorder %v892, 0
          %vm1040 = vcmp.ne.s32.totalorder %v903, 0
          %vm1041 = vcmp.ne.s32.totalorder %v914, 0
          %vm1042 = vcmp.ne.s32.totalorder %v925, 0
          %vm1043 = vcmp.ne.s32.totalorder %v936, 0
          %vm1044 = vcmp.ne.s32.totalorder %v947, 0
          %vm1045 = vcmp.ne.s32.totalorder %v958, 0
          %vm1046 = vcmp.ne.s32.totalorder %v969, 0
          %vm1047 = vcmp.ne.s32.totalorder %v980, 0
          %vm1048 = vcmp.ne.s32.totalorder %v991, 0
          %vm1049 = vcmp.ne.s32.totalorder %v1002, 0
          %vm1050 = vcmp.ne.s32.totalorder %v1013, 0
          %vm1051 = vcmp.ne.s32.totalorder %v1024, 0
          %vm1052 = vcmp.ne.s32.totalorder %v1035, 0
          %vm1053 = vcmp.lt.s32.totalorder %v859, 0
          %vm1054 = vcmp.lt.s32.totalorder %v870, 0
          %vm1055 = vcmp.lt.s32.totalorder %v881, 0
          %vm1056 = vcmp.lt.s32.totalorder %v892, 0
          %vm1057 = vcmp.lt.s32.totalorder %v903, 0
          %vm1058 = vcmp.lt.s32.totalorder %v914, 0
          %vm1059 = vcmp.lt.s32.totalorder %v925, 0
          %vm1060 = vcmp.lt.s32.totalorder %v936, 0
          %vm1061 = vcmp.lt.s32.totalorder %v947, 0
          %vm1062 = vcmp.lt.s32.totalorder %v958, 0
          %vm1063 = vcmp.lt.s32.totalorder %v969, 0
          %vm1064 = vcmp.lt.s32.totalorder %v980, 0
          %vm1065 = vcmp.lt.s32.totalorder %v991, 0
          %vm1066 = vcmp.lt.s32.totalorder %v1002, 0
          %vm1067 = vcmp.lt.s32.totalorder %v1013, 0
          %vm1068 = vcmp.lt.s32.totalorder %v1024, 0
          %vm1069 = vcmp.lt.s32.totalorder %v1035, 0
          %vm1070 = vmand %vm1053, %vm1036
          %vm1071 = vmand %vm1054, %vm1037
          %vm1072 = vmand %vm1055, %vm1038
          %vm1073 = vmand %vm1056, %vm1039
          %vm1074 = vmand %vm1057, %vm1040
          %vm1075 = vmand %vm1058, %vm1041
          %vm1076 = vmand %vm1059, %vm1042
          %vm1077 = vmand %vm1060, %vm1043
          %vm1078 = vmand %vm1061, %vm1044
          %vm1079 = vmand %vm1062, %vm1045
          %vm1080 = vmand %vm1063, %vm1046
          %vm1081 = vmand %vm1064, %vm1047
          %vm1082 = vmand %vm1065, %vm1048
          %vm1083 = vmand %vm1066, %vm1049
          %vm1084 = vmand %vm1067, %vm1050
          %vm1085 = vmand %vm1068, %vm1051
          %vm1086 = vmand %vm1069, %vm1052
          %v1087 = vadd.s32 %v859, 17
          %v1088 = vadd.s32 %v870, 17
          %v1089 = vadd.s32 %v881, 17
          %v1090 = vadd.s32 %v892, 17
          %v1091 = vadd.s32 %v903, 17
          %v1092 = vadd.s32 %v914, 17
          %v1093 = vadd.s32 %v925, 17
          %v1094 = vadd.s32 %v936, 17
          %v1095 = vadd.s32 %v947, 17
          %v1096 = vadd.s32 %v958, 17
          %v1097 = vadd.s32 %v969, 17
          %v1098 = vadd.s32 %v980, 17
          %v1099 = vadd.s32 %v991, 17
          %v1100 = vadd.s32 %v1002, 17
          %v1101 = vadd.s32 %v1013, 17
          %v1102 = vadd.s32 %v1024, 17
          %v1103 = vadd.s32 %v1035, 17
          %v1104 = vsel %vm1070, %v1087, %v859
          %v1105 = vsel %vm1071, %v1088, %v870
          %v1106 = vsel %vm1072, %v1089, %v881
          %v1107 = vsel %vm1073, %v1090, %v892
          %v1108 = vsel %vm1074, %v1091, %v903
          %v1109 = vsel %vm1075, %v1092, %v914
          %v1110 = vsel %vm1076, %v1093, %v925
          %v1111 = vsel %vm1077, %v1094, %v936
          %v1112 = vsel %vm1078, %v1095, %v947
          %v1113 = vsel %vm1079, %v1096, %v958
          %v1114 = vsel %vm1080, %v1097, %v969
          %v1115 = vsel %vm1081, %v1098, %v980
          %v1116 = vsel %vm1082, %v1099, %v991
          %v1117 = vsel %vm1083, %v1100, %v1002
          %v1118 = vsel %vm1084, %v1101, %v1013
          %v1119 = vsel %vm1085, %v1102, %v1024
          %v1120 = vsel %vm1086, %v1103, %v1035
          %vm1121 = vcmp.eq.s32.totalorder %v1104, 0
          %vm1122 = vcmp.eq.s32.totalorder %v1105, 0
          %vm1123 = vcmp.eq.s32.totalorder %v1106, 0
          %vm1124 = vcmp.eq.s32.totalorder %v1107, 0
          %vm1125 = vcmp.eq.s32.totalorder %v1108, 0
          %vm1126 = vcmp.eq.s32.totalorder %v1109, 0
          %vm1127 = vcmp.eq.s32.totalorder %v1110, 0
          %vm1128 = vcmp.eq.s32.totalorder %v1111, 0
          %vm1129 = vcmp.eq.s32.totalorder %v1112, 0
          %vm1130 = vcmp.eq.s32.totalorder %v1113, 0
          %vm1131 = vcmp.eq.s32.totalorder %v1114, 0
          %vm1132 = vcmp.eq.s32.totalorder %v1115, 0
          %vm1133 = vcmp.eq.s32.totalorder %v1116, 0
          %vm1134 = vcmp.eq.s32.totalorder %v1117, 0
          %vm1135 = vcmp.eq.s32.totalorder %v1118, 0
          %vm1136 = vcmp.eq.s32.totalorder %v1119, 0
          %vm1137 = vcmp.eq.s32.totalorder %v1120, 0
          %v1138 = vsel %vm1121, %v814, 1.0
          %v1139 = vsel %vm1122, %v815, 1.0
          %v1140 = vsel %vm1123, %v816, 1.0
          %v1141 = vsel %vm1124, %v817, 1.0
          %v1142 = vsel %vm1125, %v818, 1.0
          %v1143 = vsel %vm1126, %v819, 1.0
          %v1144 = vsel %vm1127, %v820, 1.0
          %v1145 = vsel %vm1128, %v821, 1.0
          %v1146 = vsel %vm1129, %v822, 1.0
          %v1147 = vsel %vm1130, %v823, 1.0
          %v1148 = vsel %vm1131, %v824, 1.0
          %v1149 = vsel %vm1132, %v825, 1.0
          %v1150 = vsel %vm1133, %v826, 1.0
          %v1151 = vsel %vm1134, %v827, 1.0
          %v1152 = vsel %vm1135, %v828, 1.0
          %v1153 = vsel %vm1136, %v829, 1.0
          %v1154 = vsel %vm1137, %v830, 1.0
          %v1155 = vlog2.pop %v1138
          %v1156 = vmul.f32 %v1155, 0.6931472
          %v1157 = vlog2.pop %v1139
          %v1158 = vmul.f32 %v1157, 0.6931472
          %v1159 = vlog2.pop %v1140
          %v1160 = vmul.f32 %v1159, 0.6931472
          %v1161 = vlog2.pop %v1141
          %v1162 = vmul.f32 %v1161, 0.6931472
          %v1163 = vlog2.pop %v1142
          %v1164 = vmul.f32 %v1163, 0.6931472
          %v1165 = vlog2.pop %v1143
          %v1166 = vmul.f32 %v1165, 0.6931472
          %v1167 = vlog2.pop %v1144
          %v1168 = vmul.f32 %v1167, 0.6931472
          %v1169 = vlog2.pop %v1145
          %v1170 = vmul.f32 %v1169, 0.6931472
          %v1171 = vlog2.pop %v1146
          %v1172 = vmul.f32 %v1171, 0.6931472
          %v1173 = vlog2.pop %v1147
          %v1174 = vmul.f32 %v1173, 0.6931472
          %v1175 = vlog2.pop %v1148
          %v1176 = vmul.f32 %v1175, 0.6931472
          %v1177 = vlog2.pop %v1149
          %v1178 = vmul.f32 %v1177, 0.6931472
          %v1179 = vlog2.pop %v1150
          %v1180 = vmul.f32 %v1179, 0.6931472
          %v1181 = vlog2.pop %v1151
          %v1182 = vmul.f32 %v1181, 0.6931472
          %v1183 = vlog2.pop %v1152
          %v1184 = vmul.f32 %v1183, 0.6931472
          %v1185 = vlog2.pop %v1153
          %v1186 = vmul.f32 %v1185, 0.6931472
          %v1187 = vlog2.pop %v1154
          %v1188 = vmul.f32 %v1187, 0.6931472
          %v1189 = vadd.f32 %v814, 0.0160001
          %v1190 = vadd.f32 %v815, 0.0160001
          %v1191 = vadd.f32 %v816, 0.0160001
          %v1192 = vadd.f32 %v817, 0.0160001
          %v1193 = vadd.f32 %v818, 0.0160001
          %v1194 = vadd.f32 %v819, 0.0160001
          %v1195 = vadd.f32 %v820, 0.0160001
          %v1196 = vadd.f32 %v821, 0.0160001
          %v1197 = vadd.f32 %v822, 0.0160001
          %v1198 = vadd.f32 %v823, 0.0160001
          %v1199 = vadd.f32 %v824, 0.0160001
          %v1200 = vadd.f32 %v825, 0.0160001
          %v1201 = vadd.f32 %v826, 0.0160001
          %v1202 = vadd.f32 %v827, 0.0160001
          %v1203 = vadd.f32 %v828, 0.0160001
          %v1204 = vadd.f32 %v829, 0.0160001
          %v1205 = vadd.f32 %v830, 0.0160001
          %v1206 = vlog2.pop %v1189
          %v1207 = vmul.f32 %v1206, 0.6931472
          %v1208 = vlog2.pop %v1190
          %v1209 = vmul.f32 %v1208, 0.6931472
          %v1210 = vlog2.pop %v1191
          %v1211 = vmul.f32 %v1210, 0.6931472
          %v1212 = vlog2.pop %v1192
          %v1213 = vmul.f32 %v1212, 0.6931472
          %v1214 = vlog2.pop %v1193
          %v1215 = vmul.f32 %v1214, 0.6931472
          %v1216 = vlog2.pop %v1194
          %v1217 = vmul.f32 %v1216, 0.6931472
          %v1218 = vlog2.pop %v1195
          %v1219 = vmul.f32 %v1218, 0.6931472
          %v1220 = vlog2.pop %v1196
          %v1221 = vmul.f32 %v1220, 0.6931472
          %v1222 = vlog2.pop %v1197
          %v1223 = vmul.f32 %v1222, 0.6931472
          %v1224 = vlog2.pop %v1198
          %v1225 = vmul.f32 %v1224, 0.6931472
          %v1226 = vlog2.pop %v1199
          %v1227 = vmul.f32 %v1226, 0.6931472
          %v1228 = vlog2.pop %v1200
          %v1229 = vmul.f32 %v1228, 0.6931472
          %v1230 = vlog2.pop %v1201
          %v1231 = vmul.f32 %v1230, 0.6931472
          %v1232 = vlog2.pop %v1202
          %v1233 = vmul.f32 %v1232, 0.6931472
          %v1234 = vlog2.pop %v1203
          %v1235 = vmul.f32 %v1234, 0.6931472
          %v1236 = vlog2.pop %v1204
          %v1237 = vmul.f32 %v1236, 0.6931472
          %v1238 = vlog2.pop %v1205
          %v1239 = vmul.f32 %v1238, 0.6931472
          %v1240 = vsub.f32 %v1156, %v1207
          %v1241 = vsub.f32 %v1158, %v1209
          %v1242 = vsub.f32 %v1160, %v1211
          %v1243 = vsub.f32 %v1162, %v1213
          %v1244 = vsub.f32 %v1164, %v1215
          %v1245 = vsub.f32 %v1166, %v1217
          %v1246 = vsub.f32 %v1168, %v1219
          %v1247 = vsub.f32 %v1170, %v1221
          %v1248 = vsub.f32 %v1172, %v1223
          %v1249 = vsub.f32 %v1174, %v1225
          %v1250 = vsub.f32 %v1176, %v1227
          %v1251 = vsub.f32 %v1178, %v1229
          %v1252 = vsub.f32 %v1180, %v1231
          %v1253 = vsub.f32 %v1182, %v1233
          %v1254 = vsub.f32 %v1184, %v1235
          %v1255 = vsub.f32 %v1186, %v1237
          %v1256 = vsub.f32 %v1188, %v1239
          %v1257 = vlaneseq
          %v1258 = vshrl.u32 %v1257, 7
          %s1259 = smul.u32 %s13, 8
          %v1260 = vstv %s1259
          %v1261 = vadd.s32 %v1258, %v1260
          %vm1262 = vcmp.lt.s32.totalorder %v1261, 21
          %v1263 = vsel %vm1262, %v1240, 0.0
          %v1264 = vsel %vm1262, %v1241, 0.0
          %v1265 = vsel %vm1262, %v1242, 0.0
          %v1266 = vsel %vm1262, %v1243, 0.0
          %v1267 = vsel %vm1262, %v1244, 0.0
          %v1268 = vsel %vm1262, %v1245, 0.0
          %v1269 = vsel %vm1262, %v1246, 0.0
          %v1270 = vsel %vm1262, %v1247, 0.0
          %v1271 = vsel %vm1262, %v1248, 0.0
          %v1272 = vsel %vm1262, %v1249, 0.0
          %v1273 = vsel %vm1262, %v1250, 0.0
          %v1274 = vsel %vm1262, %v1251, 0.0
          %v1275 = vsel %vm1262, %v1252, 0.0
          %v1276 = vsel %vm1262, %v1253, 0.0
          %v1277 = vsel %vm1262, %v1254, 0.0
          %v1278 = vsel %vm1262, %v1255, 0.0
          %v1279 = vsel %vm1262, %v1256, 0.0
          %v1280 = vld [vmem:[#allocation2] sm:$0xff]
          %v1281 = vld [vmem:[#allocation2 + $0x8] sm:$0xff]
          %v1282 = vld [vmem:[#allocation2 + $0x10] sm:$0x1]
          %v1283 = vrot.slane %v1263, 4
          %v1284 = vadd.f32 %v1263, %v1283
          %v1285 = vrot.slane %v1284, 2
          %v1286 = vadd.f32 %v1284, %v1285
          %v1287 = vrot.slane %v1286, 1
          %v1288 = vadd.f32 %v1286, %v1287
          %v1289 = vrot.slane %v1264, 4
          %v1290 = vadd.f32 %v1264, %v1289
          %v1291 = vrot.slane %v1290, 2
          %v1292 = vadd.f32 %v1290, %v1291
          %v1293 = vrot.slane %v1292, 1
          %v1294 = vadd.f32 %v1292, %v1293
          %v1295 = vrot.slane %v1265, 4
          %v1296 = vadd.f32 %v1265, %v1295
          %v1297 = vrot.slane %v1296, 2
          %v1298 = vadd.f32 %v1296, %v1297
          %v1299 = vrot.slane %v1298, 1
          %v1300 = vadd.f32 %v1298, %v1299
          %v1301 = vrot.slane %v1266, 4
          %v1302 = vadd.f32 %v1266, %v1301
          %v1303 = vrot.slane %v1302, 2
          %v1304 = vadd.f32 %v1302, %v1303
          %v1305 = vrot.slane %v1304, 1
          %v1306 = vadd.f32 %v1304, %v1305
          %v1307 = vrot.slane %v1267, 4
          %v1308 = vadd.f32 %v1267, %v1307
          %v1309 = vrot.slane %v1308, 2
          %v1310 = vadd.f32 %v1308, %v1309
          %v1311 = vrot.slane %v1310, 1
          %v1312 = vadd.f32 %v1310, %v1311
          %v1313 = vrot.slane %v1268, 4
          %v1314 = vadd.f32 %v1268, %v1313
          %v1315 = vrot.slane %v1314, 2
          %v1316 = vadd.f32 %v1314, %v1315
          %v1317 = vrot.slane %v1316, 1
          %v1318 = vadd.f32 %v1316, %v1317
          %v1319 = vrot.slane %v1269, 4
          %v1320 = vadd.f32 %v1269, %v1319
          %v1321 = vrot.slane %v1320, 2
          %v1322 = vadd.f32 %v1320, %v1321
          %v1323 = vrot.slane %v1322, 1
          %v1324 = vadd.f32 %v1322, %v1323
          %v1325 = vrot.slane %v1270, 4
          %v1326 = vadd.f32 %v1270, %v1325
          %v1327 = vrot.slane %v1326, 2
          %v1328 = vadd.f32 %v1326, %v1327
          %v1329 = vrot.slane %v1328, 1
          %v1330 = vadd.f32 %v1328, %v1329
          %v1331 = vrot.slane %v1271, 4
          %v1332 = vadd.f32 %v1271, %v1331
          %v1333 = vrot.slane %v1332, 2
          %v1334 = vadd.f32 %v1332, %v1333
          %v1335 = vrot.slane %v1334, 1
          %v1336 = vadd.f32 %v1334, %v1335
          %v1337 = vrot.slane %v1272, 4
          %v1338 = vadd.f32 %v1272, %v1337
          %v1339 = vrot.slane %v1338, 2
          %v1340 = vadd.f32 %v1338, %v1339
          %v1341 = vrot.slane %v1340, 1
          %v1342 = vadd.f32 %v1340, %v1341
          %v1343 = vrot.slane %v1273, 4
          %v1344 = vadd.f32 %v1273, %v1343
          %v1345 = vrot.slane %v1344, 2
          %v1346 = vadd.f32 %v1344, %v1345
          %v1347 = vrot.slane %v1346, 1
          %v1348 = vadd.f32 %v1346, %v1347
          %v1349 = vrot.slane %v1274, 4
          %v1350 = vadd.f32 %v1274, %v1349
          %v1351 = vrot.slane %v1350, 2
          %v1352 = vadd.f32 %v1350, %v1351
          %v1353 = vrot.slane %v1352, 1
          %v1354 = vadd.f32 %v1352, %v1353
          %v1355 = vrot.slane %v1275, 4
          %v1356 = vadd.f32 %v1275, %v1355
          %v1357 = vrot.slane %v1356, 2
          %v1358 = vadd.f32 %v1356, %v1357
          %v1359 = vrot.slane %v1358, 1
          %v1360 = vadd.f32 %v1358, %v1359
          %v1361 = vrot.slane %v1276, 4
          %v1362 = vadd.f32 %v1276, %v1361
          %v1363 = vrot.slane %v1362, 2
          %v1364 = vadd.f32 %v1362, %v1363
          %v1365 = vrot.slane %v1364, 1
          %v1366 = vadd.f32 %v1364, %v1365
          %v1367 = vrot.slane %v1277, 4
          %v1368 = vadd.f32 %v1277, %v1367
          %v1369 = vrot.slane %v1368, 2
          %v1370 = vadd.f32 %v1368, %v1369
          %v1371 = vrot.slane %v1370, 1
          %v1372 = vadd.f32 %v1370, %v1371
          %v1373 = vrot.slane %v1278, 4
          %v1374 = vadd.f32 %v1278, %v1373
          %v1375 = vrot.slane %v1374, 2
          %v1376 = vadd.f32 %v1374, %v1375
          %v1377 = vrot.slane %v1376, 1
          %v1378 = vadd.f32 %v1376, %v1377
          %v1379 = vrot.slane %v1279, 4
          %v1380 = vadd.f32 %v1279, %v1379
          %v1381 = vrot.slane %v1380, 2
          %v1382 = vadd.f32 %v1380, %v1381
          %v1383 = vrot.slane %v1382, 1
          %v1384 = vadd.f32 %v1382, %v1383
          %v1402 = vcombine.low %v1288, %v1294
          %v1403 = vcombine.low %v1300, %v1306
          %v1404 = vcombine.low %v1312, %v1318
          %v1405 = vcombine.low %v1324, %v1330
          %v1407 = vunpack.c.l.s4 1966171168
          %v1408 = vunpack.c.0.s8 %v1407
          %v1409 = vlaneseq
          %v1410 = vshrl.u32 %v1409, 7
          %v1411 = vsub.s32 %v1408, %v1410
          %v1412 = vrot.slane %v1402, %v1411
          %v1414 = vunpack.c.l.s4 1966171168
          %v1415 = vunpack.c.0.s8 %v1414
          %v1416 = vlaneseq
          %v1417 = vshrl.u32 %v1416, 7
          %v1418 = vsub.s32 %v1415, %v1417
          %v1419 = vrot.slane %v1403, %v1418
          %v1421 = vunpack.c.l.s4 1966171168
          %v1422 = vunpack.c.0.s8 %v1421
          %v1423 = vlaneseq
          %v1424 = vshrl.u32 %v1423, 7
          %v1425 = vsub.s32 %v1422, %v1424
          %v1426 = vrot.slane %v1404, %v1425
          %v1428 = vunpack.c.l.s4 1966171168
          %v1429 = vunpack.c.0.s8 %v1428
          %v1430 = vlaneseq
          %v1431 = vshrl.u32 %v1430, 7
          %v1432 = vsub.s32 %v1429, %v1431
          %v1433 = vrot.slane %v1405, %v1432
          %v1434 = vcombine.low %v1412, %v1419
          %v1435 = vcombine.low %v1426, %v1433
          %v1437 = vunpack.c.l.s4 1966171168
          %v1438 = vunpack.c.0.s8 %v1437
          %v1439 = vlaneseq
          %v1440 = vshrl.u32 %v1439, 7
          %v1441 = vsub.s32 %v1438, %v1440
          %v1442 = vrot.slane %v1434, %v1441
          %v1444 = vunpack.c.l.s4 1966171168
          %v1445 = vunpack.c.0.s8 %v1444
          %v1446 = vlaneseq
          %v1447 = vshrl.u32 %v1446, 7
          %v1448 = vsub.s32 %v1445, %v1447
          %v1449 = vrot.slane %v1435, %v1448
          %v1450 = vcombine.low %v1442, %v1449
          %v1451 = vcombine.low %v1336, %v1342
          %v1452 = vcombine.low %v1348, %v1354
          %v1453 = vcombine.low %v1360, %v1366
          %v1454 = vcombine.low %v1372, %v1378
          %v1456 = vunpack.c.l.s4 1966171168
          %v1457 = vunpack.c.0.s8 %v1456
          %v1458 = vlaneseq
          %v1459 = vshrl.u32 %v1458, 7
          %v1460 = vsub.s32 %v1457, %v1459
          %v1461 = vrot.slane %v1451, %v1460
          %v1463 = vunpack.c.l.s4 1966171168
          %v1464 = vunpack.c.0.s8 %v1463
          %v1465 = vlaneseq
          %v1466 = vshrl.u32 %v1465, 7
          %v1467 = vsub.s32 %v1464, %v1466
          %v1468 = vrot.slane %v1452, %v1467
          %v1470 = vunpack.c.l.s4 1966171168
          %v1471 = vunpack.c.0.s8 %v1470
          %v1472 = vlaneseq
          %v1473 = vshrl.u32 %v1472, 7
          %v1474 = vsub.s32 %v1471, %v1473
          %v1475 = vrot.slane %v1453, %v1474
          %v1477 = vunpack.c.l.s4 1966171168
          %v1478 = vunpack.c.0.s8 %v1477
          %v1479 = vlaneseq
          %v1480 = vshrl.u32 %v1479, 7
          %v1481 = vsub.s32 %v1478, %v1480
          %v1482 = vrot.slane %v1454, %v1481
          %v1483 = vcombine.low %v1461, %v1468
          %v1484 = vcombine.low %v1475, %v1482
          %v1486 = vunpack.c.l.s4 1966171168
          %v1487 = vunpack.c.0.s8 %v1486
          %v1488 = vlaneseq
          %v1489 = vshrl.u32 %v1488, 7
          %v1490 = vsub.s32 %v1487, %v1489
          %v1491 = vrot.slane %v1483, %v1490
          %v1493 = vunpack.c.l.s4 1966171168
          %v1494 = vunpack.c.0.s8 %v1493
          %v1495 = vlaneseq
          %v1496 = vshrl.u32 %v1495, 7
          %v1497 = vsub.s32 %v1494, %v1496
          %v1498 = vrot.slane %v1484, %v1497
          %v1499 = vcombine.low %v1491, %v1498
          %v1501 = vunpack.c.l.s4 1966171168
          %v1502 = vunpack.c.0.s8 %v1501
          %v1503 = vlaneseq
          %v1504 = vshrl.u32 %v1503, 7
          %v1505 = vsub.s32 %v1502, %v1504
          %v1506 = vrot.slane %v1384, %v1505
          %v1508 = vunpack.c.l.s4 1966171168
          %v1509 = vunpack.c.0.s8 %v1508
          %v1510 = vlaneseq
          %v1511 = vshrl.u32 %v1510, 7
          %v1512 = vsub.s32 %v1509, %v1511
          %v1513 = vrot.slane %v1506, %v1512
          %v1517 = vadd.f32 %v1280, %v1450
          %v1518 = vadd.f32 %v1281, %v1499
          %v1519 = vadd.f32 %v1282, %v1513
          %1520 = vst [vmem:[#allocation2] sm:$0xff] %v1517
          %1521 = vst [vmem:[#allocation2 + $0x8] sm:$0xff] %v1518
          %v1522 = vlaneseq
          %vm1523 = vcmp.ge.s32.totalorder %v1522, 0
          %vm1524 = vcmp.lt.s32.totalorder %v1522, 128
          %vm1525 = vmand %vm1523, %vm1524
          %1526 = vst.msk [vmem:[#allocation2 + $0x10] sm:$0x1] %vm1525, %v1519
          %v1527 = vld [vmem:[#allocation2] sm:$0xff]
          %v1528 = vld [vmem:[#allocation2 + $0x8] sm:$0xff]
          %v1529 = vld [vmem:[#allocation2 + $0x10] sm:$0x1]
          %v1533 = vlaneseq
          %v1534 = vshrl.u32 %v1533, 7
          %v1535 = vsub.s32 0, %v1534
          %v1536 = vrot.slane %v1527, %v1535
          %v1537 = vlaneseq
          %v1538 = vshrl.u32 %v1537, 7
          %v1539 = vsub.s32 1, %v1538
          %v1540 = vrot.slane %v1527, %v1539
          %v1541 = vlaneseq
          %v1542 = vshrl.u32 %v1541, 7
          %v1543 = vsub.s32 2, %v1542
          %v1544 = vrot.slane %v1527, %v1543
          %v1545 = vlaneseq
          %v1546 = vshrl.u32 %v1545, 7
          %v1547 = vsub.s32 3, %v1546
          %v1548 = vrot.slane %v1527, %v1547
          %v1549 = vlaneseq
          %v1550 = vshrl.u32 %v1549, 7
          %v1551 = vsub.s32 4, %v1550
          %v1552 = vrot.slane %v1527, %v1551
          %v1553 = vlaneseq
          %v1554 = vshrl.u32 %v1553, 7
          %v1555 = vsub.s32 5, %v1554
          %v1556 = vrot.slane %v1527, %v1555
          %v1557 = vlaneseq
          %v1558 = vshrl.u32 %v1557, 7
          %v1559 = vsub.s32 6, %v1558
          %v1560 = vrot.slane %v1527, %v1559
          %v1561 = vlaneseq
          %v1562 = vshrl.u32 %v1561, 7
          %v1563 = vsub.s32 7, %v1562
          %v1564 = vrot.slane %v1527, %v1563
          %v1565 = vlaneseq
          %v1566 = vshrl.u32 %v1565, 7
          %v1567 = vsub.s32 0, %v1566
          %v1568 = vrot.slane %v1528, %v1567
          %v1569 = vlaneseq
          %v1570 = vshrl.u32 %v1569, 7
          %v1571 = vsub.s32 1, %v1570
          %v1572 = vrot.slane %v1528, %v1571
          %v1573 = vlaneseq
          %v1574 = vshrl.u32 %v1573, 7
          %v1575 = vsub.s32 2, %v1574
          %v1576 = vrot.slane %v1528, %v1575
          %v1577 = vlaneseq
          %v1578 = vshrl.u32 %v1577, 7
          %v1579 = vsub.s32 3, %v1578
          %v1580 = vrot.slane %v1528, %v1579
          %v1581 = vlaneseq
          %v1582 = vshrl.u32 %v1581, 7
          %v1583 = vsub.s32 4, %v1582
          %v1584 = vrot.slane %v1528, %v1583
          %v1585 = vlaneseq
          %v1586 = vshrl.u32 %v1585, 7
          %v1587 = vsub.s32 5, %v1586
          %v1588 = vrot.slane %v1528, %v1587
          %v1589 = vlaneseq
          %v1590 = vshrl.u32 %v1589, 7
          %v1591 = vsub.s32 6, %v1590
          %v1592 = vrot.slane %v1528, %v1591
          %v1593 = vlaneseq
          %v1594 = vshrl.u32 %v1593, 7
          %v1595 = vsub.s32 7, %v1594
          %v1596 = vrot.slane %v1528, %v1595
          %v1597 = vlaneseq
          %v1598 = vshrl.u32 %v1597, 7
          %v1599 = vsub.s32 0, %v1598
          %v1600 = vrot.slane %v1529, %v1599
          %vm1618 = vcmask 1040384
          %v1619 = vsel %vm1618, %v1536, 0.0
          %v1620 = vsel %vm1618, %v1540, 0.0
          %v1621 = vadd.f32 %v1619, %v1620
          %v1622 = vsel %vm1618, %v1544, 0.0
          %v1623 = vadd.f32 %v1621, %v1622
          %v1624 = vsel %vm1618, %v1548, 0.0
          %v1625 = vadd.f32 %v1623, %v1624
          %v1626 = vsel %vm1618, %v1552, 0.0
          %v1627 = vadd.f32 %v1625, %v1626
          %v1628 = vsel %vm1618, %v1556, 0.0
          %v1629 = vadd.f32 %v1627, %v1628
          %v1630 = vsel %vm1618, %v1560, 0.0
          %v1631 = vadd.f32 %v1629, %v1630
          %v1632 = vsel %vm1618, %v1564, 0.0
          %v1633 = vadd.f32 %v1631, %v1632
          %v1634 = vsel %vm1618, %v1568, 0.0
          %v1635 = vadd.f32 %v1633, %v1634
          %v1636 = vsel %vm1618, %v1572, 0.0
          %v1637 = vadd.f32 %v1635, %v1636
          %v1638 = vsel %vm1618, %v1576, 0.0
          %v1639 = vadd.f32 %v1637, %v1638
          %v1640 = vsel %vm1618, %v1580, 0.0
          %v1641 = vadd.f32 %v1639, %v1640
          %v1642 = vsel %vm1618, %v1584, 0.0
          %v1643 = vadd.f32 %v1641, %v1642
          %v1644 = vsel %vm1618, %v1588, 0.0
          %v1645 = vadd.f32 %v1643, %v1644
          %v1646 = vsel %vm1618, %v1592, 0.0
          %v1647 = vadd.f32 %v1645, %v1646
          %v1648 = vsel %vm1618, %v1596, 0.0
          %v1649 = vadd.f32 %v1647, %v1648
          %v1650 = vsel %vm1618, %v1600, 0.0
          %v1651 = vadd.f32 %v1649, %v1650
          %1652 = vadd.xlane.f32.xlu0 %v1651
          %v1653 = vpop.xlane.xlu0 %1652
          %v1654 = vadd.f32 %v1653, -177845.25
          %v1655 = vsub.f32 0.0, %v1654
          %v1656 = vrcp.pop 2688.0
          %v1657 = vmul.f32 %v1655, %v1656
          %vm1658 = vcmask 0
          %1659 = vst.msk [vmem:[#allocation3] sm:$0x1] %vm1658, %v1657
        $region36: #{nce_criterion.1} parent=23 // pred_fallthru
          _
        // Predicated region
        $region37: #{nce_criterion.1} parent=23 // pred_check
          %p1660 = pneg %p52
        $region38: #{nce_criterion.1} parent=23 // pred_check_branch
          %1662 = sbr.rel (%p1660) target = $region40
        $region39: #{nce_criterion.1} parent=23 // pred_region
          %s1664 = ssub.s32 16, 16
          %1665 = vsyncadd [#allocation4], %s1664
          %s1667 = sshll.u32 [#allocation3], 4
          %s1668 = int_to_ptr.vmem [resolvable:$true] %s1667
          %1670 = dma.vmem_to_hbm [thread:$0]  %s1668, 16, %s1, [#allocation4]
        $region40: #{nce_criterion.1} parent=23 // pred_fallthru
          _
        // Predicated region
        $region41: #{nce_criterion.1} parent=23 // pred_check
          %p1671 = pneg %p52
        $region42: #{nce_criterion.1} parent=23 // pred_check_branch
          %1673 = sbr.rel (%p1671) target = $region44
        $region43: #{nce_criterion.1} parent=23 // pred_region
          %1674 = dma.done [#allocation4], 16
        $region44: #{nce_criterion.1} parent=23 // pred_fallthru
          _
      $region24: #{nce_criterion.1} parent=5 // pred_fallthru
        _
      %p1675 = scmp.le.s32.totalorder 2, %s8
      // Predicated region
      $region45: #{nce_criterion.1} parent=5 // pred_check
        %p1676 = pneg %p1675
      $region46: #{nce_criterion.1} parent=5 // pred_check_branch
        %1678 = sbr.rel (%p1676) target = $region48
      $region47: #{nce_criterion.1} parent=5 // pred_region
        %s1679 = ssub.s32 %s8, 2
      $region48: #{nce_criterion.1} parent=5 // pred_fallthru
        _
    $region6: #{nce_criterion.1} parent=1 // loop_footer
      %s12 = sadd.s32 1, %s8
    $region7: #{nce_criterion.1} parent=1 // loop_footer_branch
      %7 = sbr.rel target = $region3
    $region8: #{nce_criterion.1} parent=1 // loop_exit
      _
    %1680 = vsyncpa [#allocation4], 1
    %s1681 = scalar_lea.sflag [#allocation4], 1
    %1682 = vsyncpa %s1681, 1

</llo_original>
